<compile_context>
chip_gen: v6e
topology: v6e:2x2x1
jax: 0.10.0
libtpu: 0.0.40
codegen_flags: <defaults>
</compile_context>

<pallas_src>
import jax
import jax.numpy as jnp
from jax.experimental import pallas as pl
from jax.experimental.pallas import tpu as pltpu


def _round_up(x, m):
    return ((x + m - 1) // m) * m


def _cdiv(a, b):
    return -(-a // b)


def _num_tensorcores_per_chip():
    """2 on v7x (dual TensorCore), 1 on v5e/v6e.  Best-effort string probe."""
    try:
        kind = jax.devices()[0].device_kind.lower()
    except Exception:
        return 1
    return 2 if "v7" in kind else 1


def _pick_batch_tile(B, n_genes_p, n_cores, *, max_tile=1024,
                     x_vmem_budget=8 << 20):
    """Few, large grid steps: grid=(1,) on single-core chips, an even step
    count on v7x.  The f32 input tile (double-buffered) is capped to
    x_vmem_budget bytes so the tiling stays safe if nGenes grows."""
    Bp = _round_up(B, 8)
    rows_by_vmem = max(8, (x_vmem_budget // (n_genes_p * 4 * 2)) // 8 * 8)
    cap = max(8, min(max_tile, rows_by_vmem))
    min_steps = 2 if n_cores >= 2 else 1
    steps = max(min_steps, _cdiv(Bp, cap))
    if n_cores >= 2 and steps % n_cores:
        steps += n_cores - (steps % n_cores)   # keep both TCs evenly loaded
    bt = min(cap, _round_up(_cdiv(Bp, steps), 8))
    return bt


def _pack_params(params, n_genes_p):
    """Pack the 5 (W, b) pairs into one bf16 weight slab and one f32 bias slab.

    Every layer width is zero-padded up to a multiple of 128 (lane-dense);
    padded weight rows/cols and padded bias entries are 0, so padded
    activation columns stay exactly 0 through every ReLU -> exact no-op.
    Returns (w_slab, b_slab, dims, row_offsets) with static python ints.
    """
    out_dims = [w.shape[1] for (w, _) in params]
    out_dims_p = [_round_up(d, 128) for d in out_dims]
    in_dims_p = [n_genes_p] + out_dims_p[:-1]
    max_w = max(out_dims_p)

    w_blocks, b_rows, offsets = [], [], []
    off = 0
    for (w, b), d_in_p, d_out_p in zip(params, in_dims_p, out_dims_p):
        fi, fo = w.shape
        wb = jnp.zeros((d_in_p, max_w), jnp.bfloat16)
        wb = wb.at[:fi, :fo].set(w.astype(jnp.bfloat16))
        w_blocks.append(wb)
        br = jnp.zeros((1, max_w), jnp.float32)
        br = br.at[:, :fo].set(jnp.reshape(b, (1, -1)).astype(jnp.float32))
        b_rows.append(br)
        offsets.append(off)
        off += d_in_p

    n_layers = len(params)
    pad_rows = _round_up(n_layers, 8) - n_layers   # sublane-aligned bias slab
    if pad_rows:
        b_rows.append(jnp.zeros((pad_rows, max_w), jnp.float32))

    w_slab = jnp.concatenate(w_blocks, axis=0)
    b_slab = jnp.concatenate(b_rows, axis=0)
    dims = tuple([n_genes_p] + out_dims_p)
    return w_slab, b_slab, dims, tuple(offsets)


def _make_mlp_kernel(dims, row_offsets):
    """Fused 5-layer MLP on one batch tile; dims / offsets are static ints."""
    n_layers = len(dims) - 1

    def kernel(x_ref, w_ref, b_ref, out_ref):
        # Per-tile in-register cast: f32 read from HBM, bf16 into the MXU.
        h = x_ref[...].astype(jnp.bfloat16)
        for li in range(n_layers):
            d_in, d_out = dims[li], dims[li + 1]
            r0 = row_offsets[li]
            w = w_ref[r0:r0 + d_in, :d_out]          # static, tile-aligned slice
            b = b_ref[li:li + 1, :d_out]              # f32 bias row
            z = jnp.dot(h, w, preferred_element_type=jnp.float32) + b
            if li < n_layers - 1:
                h = jnp.maximum(z, 0.0).astype(jnp.bfloat16)   # f32 ReLU on VPU
            else:
                out_ref[...] = z.astype(out_ref.dtype)

    return kernel


def neural_network_forward(x, params, *, max_batch_tile=1024):
    """Run the MLP forward pass.

    x:      (B, nGenes) float32
    params: list of (W, b) with W shape (in, out) [= PyTorch weight.T],
            b shape (1, out)
    Returns (B, outNeurons) float32 logits.
    """
    B, n_genes = x.shape
    out_dim = params[-1][0].shape[1]

    n_genes_p = _round_up(n_genes, 8)
    x = x.astype(jnp.float32)
    if n_genes_p != n_genes:
        # Rarely hit (only if nGenes is not a multiple of 8); zero columns are
        # a mathematical no-op against zero-padded W1 rows.
        x = jnp.pad(x, ((0, 0), (0, n_genes_p - n_genes)))

    # NOTE: packing is cheap (~KBs) but could be hoisted/precomputed once per
    # model if this forward is called in a hot loop.
    w_slab, b_slab, dims, offsets = _pack_params(params, n_genes_p)
    padded_out = dims[-1]

    n_cores = _num_tensorcores_per_chip()
    bt = _pick_batch_tile(B, n_genes_p, n_cores, max_tile=max_batch_tile)
    grid = (_cdiv(B, bt),)

    kernel = _make_mlp_kernel(dims, offsets)

    in_specs = [
        pl.BlockSpec((bt, n_genes_p), lambda i: (i, 0)),   # batch tile of x
        pl.BlockSpec(w_slab.shape, lambda i: (0, 0)),      # whole weight slab
        pl.BlockSpec(b_slab.shape, lambda i: (0, 0)),      # whole bias slab
    ]
    out_spec = pl.BlockSpec((bt, padded_out), lambda i: (i, 0))

    # Advisory cost estimate for XLA's scheduler around the custom call.
    flops = 2 * B * sum(a * b for a, b in zip(dims[:-1], dims[1:]))
    bytes_accessed = (B * n_genes_p * 4
                      + int(w_slab.size) * 2 + int(b_slab.size) * 4
                      + B * padded_out * 2)
    cost = pl.CostEstimate(flops=flops, transcendentals=0,
                           bytes_accessed=bytes_accessed)

    out_padded = pl.pallas_call(
        kernel,
        out_shape=jax.ShapeDtypeStruct((B, padded_out), jnp.bfloat16),
        grid_spec=pltpu.PrefetchScalarGridSpec(
            num_scalar_prefetch=0,
            grid=grid,
            in_specs=in_specs,
            out_specs=out_spec,
        ),
        compiler_params=pltpu.CompilerParams(
            dimension_semantics=("parallel",)),
        cost_estimate=cost,
    )(x, w_slab, b_slab)

    # Slice the lane-padded bf16 logits back to the real class count, in f32.
    return out_padded[:, :out_dim].astype(jnp.float32)


def init_params(key, layer_sizes):
    """Deterministic parameter init. Returns list of (W(in,out), b(1,out))."""
    params = []
    for (fan_in, fan_out) in zip(layer_sizes[:-1], layer_sizes[1:]):
        key, kw, kb = jax.random.split(key, 3)
        # PyTorch nn.Linear default: U(-1/sqrt(fan_in), 1/sqrt(fan_in))
        bound = 1.0 / (fan_in ** 0.5)
        w = jax.random.uniform(kw, (fan_in, fan_out), jnp.float32,
                               minval=-bound, maxval=bound)
        b = jax.random.uniform(kb, (1, fan_out), jnp.float32,
                               minval=-bound, maxval=bound)
        params.append((w, b))
    return params


def reference_forward(x, params):
    """Pure-JAX f32 reference for correctness checking."""
    h = x
    for i, (w, b) in enumerate(params):
        h = h @ w + b
        if i < len(params) - 1:
            h = jnp.maximum(h, 0.0)
    return h


if __name__ == "__main__":
    # Representative small shapes: B=512 gives grid=(1,) on v5e/v6e (whole
    # batch in one step) and two parallel 256-row steps on v7x.
    B = 512          # pseudobulk samples
    nGenes = 256
    Hs1, Hs2, Hs3, Hs4 = 128, 128, 64, 64
    outNeurons = 4   # number of class labels

    key = jax.random.PRNGKey(0)
    key, kx = jax.random.split(key)
    x = jax.random.normal(kx, (B, nGenes), jnp.float32)

    params = init_params(key, [nGenes, Hs1, Hs2, Hs3, Hs4, outNeurons])

    logits = neural_network_forward(x, params)
    logits = jax.block_until_ready(logits)

    ref = reference_forward(x, params)
    assert logits.shape == (B, outNeurons)
    max_err = float(jnp.max(jnp.abs(logits - ref)))
    # bf16 matmuls (f32 accumulation) + bf16 writeback: loosened tolerance.
    assert jnp.allclose(logits, ref, atol=5e-2, rtol=5e-2), \
        f"Pallas kernel output mismatch vs reference (max abs err {max_err})"

    print("KERNEL_OK")
</pallas_src>

<mosaic_0001>
module attributes {stable_mosaic.version = 11 : i64} {
  func.func @kernel(%arg0: i32, %arg1: memref<512x256xf32, #tpu.memory_space<vmem>>, %arg2: memref<768x128xbf16, #tpu.memory_space<vmem>>, %arg3: memref<8x128xf32, #tpu.memory_space<vmem>>, %arg4: memref<512x128xbf16, #tpu.memory_space<vmem>>) attributes {dimension_semantics = [#tpu.dimension_semantics<parallel>], iteration_bounds = array<i64: 1>, scalar_prefetch = 0 : i64, scratch_operands = 0 : i64, tpu.core_type = #tpu.core_type<tc>, window_params = [{transform_indices = @transform_0, window_bounds = array<i64: 512, 256>}, {pipeline_mode = #tpu.pipeline_mode<synchronous>, transform_indices = @transform_1, window_bounds = array<i64: 768, 128>}, {pipeline_mode = #tpu.pipeline_mode<synchronous>, transform_indices = @transform_2, window_bounds = array<i64: 8, 128>}, {transform_indices = @transform_3, window_bounds = array<i64: 512, 128>}]} {
    %c0 = arith.constant 0 : index
    %c0_0 = arith.constant 0 : index
    %0 = vector.load %arg1[%c0, %c0_0] : memref<512x256xf32, #tpu.memory_space<vmem>>, vector<512x256xf32>
    %1 = arith.truncf %0 : vector<512x256xf32> to vector<512x256xbf16>
    %c0_1 = arith.constant 0 : index
    %c0_2 = arith.constant 0 : index
    %2 = vector.load %arg2[%c0_1, %c0_2] : memref<768x128xbf16, #tpu.memory_space<vmem>>, vector<256x128xbf16>
    %c0_3 = arith.constant 0 : index
    %c0_4 = arith.constant 0 : index
    %3 = vector.load %arg3[%c0_3, %c0_4] : memref<8x128xf32, #tpu.memory_space<vmem>>, vector<1x128xf32>
    %cst = arith.constant dense<0.000000e+00> : vector<512x128xf32>
    %4 = tpu.matmul %1, %2, %cst {dimension_numbers = #tpu.dot_dimension_numbers<[1], [0], [0], [1], [0, 0, 1, 1], [], []>} : vector<512x256xbf16>, vector<256x128xbf16>, vector<512x128xf32> -> vector<512x128xf32>
    %5 = vector.broadcast %3 : vector<1x128xf32> to vector<512x128xf32>
    %6 = arith.addf %4, %5 : vector<512x128xf32>
    %cst_5 = arith.constant 0.000000e+00 : f32
    %7 = vector.broadcast %cst_5 : f32 to vector<512x128xf32>
    %8 = arith.maximumf %6, %7 : vector<512x128xf32>
    %9 = arith.truncf %8 : vector<512x128xf32> to vector<512x128xbf16>
    %c256 = arith.constant 256 : index
    %c0_6 = arith.constant 0 : index
    %10 = vector.load %arg2[%c256, %c0_6] : memref<768x128xbf16, #tpu.memory_space<vmem>>, vector<128x128xbf16>
    %c1 = arith.constant 1 : index
    %c0_7 = arith.constant 0 : index
    %11 = vector.load %arg3[%c1, %c0_7] : memref<8x128xf32, #tpu.memory_space<vmem>>, vector<1x128xf32>
    %cst_8 = arith.constant dense<0.000000e+00> : vector<512x128xf32>
    %12 = tpu.matmul %9, %10, %cst_8 {dimension_numbers = #tpu.dot_dimension_numbers<[1], [0], [0], [1], [0, 0, 1, 1], [], []>} : vector<512x128xbf16>, vector<128x128xbf16>, vector<512x128xf32> -> vector<512x128xf32>
    %13 = vector.broadcast %11 : vector<1x128xf32> to vector<512x128xf32>
    %14 = arith.addf %12, %13 : vector<512x128xf32>
    %cst_9 = arith.constant 0.000000e+00 : f32
    %15 = vector.broadcast %cst_9 : f32 to vector<512x128xf32>
    %16 = arith.maximumf %14, %15 : vector<512x128xf32>
    %17 = arith.truncf %16 : vector<512x128xf32> to vector<512x128xbf16>
    %c384 = arith.constant 384 : index
    %c0_10 = arith.constant 0 : index
    %18 = vector.load %arg2[%c384, %c0_10] : memref<768x128xbf16, #tpu.memory_space<vmem>>, vector<128x128xbf16>
    %c2 = arith.constant 2 : index
    %c0_11 = arith.constant 0 : index
    %19 = vector.load %arg3[%c2, %c0_11] : memref<8x128xf32, #tpu.memory_space<vmem>>, vector<1x128xf32>
    %cst_12 = arith.constant dense<0.000000e+00> : vector<512x128xf32>
    %20 = tpu.matmul %17, %18, %cst_12 {dimension_numbers = #tpu.dot_dimension_numbers<[1], [0], [0], [1], [0, 0, 1, 1], [], []>} : vector<512x128xbf16>, vector<128x128xbf16>, vector<512x128xf32> -> vector<512x128xf32>
    %21 = vector.broadcast %19 : vector<1x128xf32> to vector<512x128xf32>
    %22 = arith.addf %20, %21 : vector<512x128xf32>
    %cst_13 = arith.constant 0.000000e+00 : f32
    %23 = vector.broadcast %cst_13 : f32 to vector<512x128xf32>
    %24 = arith.maximumf %22, %23 : vector<512x128xf32>
    %25 = arith.truncf %24 : vector<512x128xf32> to vector<512x128xbf16>
    %c512 = arith.constant 512 : index
    %c0_14 = arith.constant 0 : index
    %26 = vector.load %arg2[%c512, %c0_14] : memref<768x128xbf16, #tpu.memory_space<vmem>>, vector<128x128xbf16>
    %c3 = arith.constant 3 : index
    %c0_15 = arith.constant 0 : index
    %27 = vector.load %arg3[%c3, %c0_15] : memref<8x128xf32, #tpu.memory_space<vmem>>, vector<1x128xf32>
    %cst_16 = arith.constant dense<0.000000e+00> : vector<512x128xf32>
    %28 = tpu.matmul %25, %26, %cst_16 {dimension_numbers = #tpu.dot_dimension_numbers<[1], [0], [0], [1], [0, 0, 1, 1], [], []>} : vector<512x128xbf16>, vector<128x128xbf16>, vector<512x128xf32> -> vector<512x128xf32>
    %29 = vector.broadcast %27 : vector<1x128xf32> to vector<512x128xf32>
    %30 = arith.addf %28, %29 : vector<512x128xf32>
    %cst_17 = arith.constant 0.000000e+00 : f32
    %31 = vector.broadcast %cst_17 : f32 to vector<512x128xf32>
    %32 = arith.maximumf %30, %31 : vector<512x128xf32>
    %33 = arith.truncf %32 : vector<512x128xf32> to vector<512x128xbf16>
    %c640 = arith.constant 640 : index
    %c0_18 = arith.constant 0 : index
    %34 = vector.load %arg2[%c640, %c0_18] : memref<768x128xbf16, #tpu.memory_space<vmem>>, vector<128x128xbf16>
    %c4 = arith.constant 4 : index
    %c0_19 = arith.constant 0 : index
    %35 = vector.load %arg3[%c4, %c0_19] : memref<8x128xf32, #tpu.memory_space<vmem>>, vector<1x128xf32>
    %cst_20 = arith.constant dense<0.000000e+00> : vector<512x128xf32>
    %36 = tpu.matmul %33, %34, %cst_20 {dimension_numbers = #tpu.dot_dimension_numbers<[1], [0], [0], [1], [0, 0, 1, 1], [], []>} : vector<512x128xbf16>, vector<128x128xbf16>, vector<512x128xf32> -> vector<512x128xf32>
    %37 = vector.broadcast %35 : vector<1x128xf32> to vector<512x128xf32>
    %38 = arith.addf %36, %37 : vector<512x128xf32>
    %39 = arith.truncf %38 : vector<512x128xf32> to vector<512x128xbf16>
    %c0_21 = arith.constant 0 : index
    %c0_22 = arith.constant 0 : index
    %40 = vector.load %arg4[%c0_21, %c0_22] : memref<512x128xbf16, #tpu.memory_space<vmem>>, vector<512x128xbf16>
    tpu.vector_store %arg4[%c0_21, %c0_22], %39 {strides = array<i32>} : memref<512x128xbf16, #tpu.memory_space<vmem>>, vector<512x128xbf16>,
    return
  }
  func.func @transform_0(%arg0: i32) -> (i32, i32) {
    %c0_i32 = arith.constant 0 : i32
    %c0_i32_0 = arith.constant 0 : i32
    return %arg0, %c0_i32 : i32, i32
  }
  func.func @transform_1(%arg0: i32) -> (i32, i32) {
    %c0_i32 = arith.constant 0 : i32
    %c0_i32_0 = arith.constant 0 : i32
    %c0_i32_1 = arith.constant 0 : i32
    return %c0_i32, %c0_i32_0 : i32, i32
  }
  func.func @transform_2(%arg0: i32) -> (i32, i32) {
    %c0_i32 = arith.constant 0 : i32
    %c0_i32_0 = arith.constant 0 : i32
    %c0_i32_1 = arith.constant 0 : i32
    return %c0_i32, %c0_i32_0 : i32, i32
  }
  func.func @transform_3(%arg0: i32) -> (i32, i32) {
    %c0_i32 = arith.constant 0 : i32
    %c0_i32_0 = arith.constant 0 : i32
    return %arg0, %c0_i32 : i32, i32
  }
}

</mosaic_0001>

<llo_original>
// kernel: tpu_custom_call.1
$region0: #{tpu_custom_call.1}
  #allocation0 [shape = 'u32[]', space=smem, size = 0x4, offset = 0x4, fixed_abs, tag = 'smem constant byte address 0x4 - core index']
  #allocation1 [shape = 'u32[144,128]{1,0:T(1,128)}', space=vmem, size = 0x12000, scoped, tag = 'internal scratch']
  %s0 = inlined_call_operand.hbm [shape: f32[512,256], index: 0, kind: input, shape index: {}]
  %s1 = inlined_call_operand.hbm [shape: bf16[768,128], index: 1, kind: input, shape index: {}]
  %s2 = inlined_call_operand.hbm [shape: f32[8,128], index: 2, kind: input, shape index: {}]
  %s3 = inlined_call_operand.hbm [shape: bf16[512,128], index: 3, kind: output, shape index: {}]
  %s4 = sld [smem:[#allocation0]]
  $region34: #{tpu_custom_call.1} parent=0
    _
  %s6 = ssub.s32 1, %s4
  %s7 = scalar_select 0, %s6, %s4
  $region1: #{tpu_custom_call.1} parent=0
    #allocation2 [shape = 'u8[524288]{0}', space=vmem, size = 0x80000, scoped, tag = 'input window, operand 0, single buffered']
    #allocation3 [shape = 's32[1]{0}', space=sflag, size = 0x4, scoped, tag = 'scoped memory for tpu_custom_call.1']
    #allocation4 [shape = 's32[1]{0}', space=sflag, size = 0x4, scoped, tag = 'scoped memory for tpu_custom_call.1']
    #allocation5 [shape = 'u8[196608]{0}', space=vmem, size = 0x30000, scoped, tag = 'input window, operand 1, single buffered']
    #allocation6 [shape = 's32[1]{0}', space=sflag, size = 0x4, scoped, tag = 'scoped memory for tpu_custom_call.1']
    #allocation7 [shape = 'u8[4096]{0}', space=vmem, size = 0x1000, scoped, tag = 'input window, operand 2, single buffered']
    #allocation8 [shape = 'u8[131072]{0}', space=vmem, size = 0x20000, scoped, tag = 'output window, operand 0, single buffered']
    %8 = vsyncpa [#allocation3], 0
    %9 = vsyncpa [#allocation6], 0
    %10 = vsyncpa [#allocation4], 0
    // Predicated region
    $region2: #{tpu_custom_call.1} parent=1 // pred_check
      _
    $region3: #{tpu_custom_call.1} parent=1 // pred_check_branch
      %12 = sbr.rel (0) target = $region5
    $region4: #{tpu_custom_call.1} parent=1 // pred_region
      %s14 = ssub.s32 16384, 16384
      %15 = vsyncadd [#allocation3], %s14
      %s16 = sshll.u32 [#allocation2], 4
      %s17 = int_to_ptr.vmem [resolvable:$true] %s16
      %22 = dma.hbm_to_vmem [thread:$0]  %s0, 16384, %s17, [#allocation3], 256, 256, 16
    $region5: #{tpu_custom_call.1} parent=1 // pred_fallthru
      _
    // Predicated region
    $region6: #{tpu_custom_call.1} parent=1 // pred_check
      _
    $region7: #{tpu_custom_call.1} parent=1 // pred_check_branch
      %24 = sbr.rel (0) target = $region9
    $region8: #{tpu_custom_call.1} parent=1 // pred_region
      %s26 = ssub.s32 6144, 6144
      %27 = vsyncadd [#allocation6], %s26
      %s28 = sshll.u32 [#allocation5], 4
      %s29 = int_to_ptr.vmem [resolvable:$true] %s28
      %34 = dma.hbm_to_vmem [thread:$0]  %s1, 6144, %s29, [#allocation6], 64, 64, 4
    $region9: #{tpu_custom_call.1} parent=1 // pred_fallthru
      _
    // Predicated region
    $region10: #{tpu_custom_call.1} parent=1 // pred_check
      _
    $region11: #{tpu_custom_call.1} parent=1 // pred_check_branch
      %36 = sbr.rel (0) target = $region13
    $region12: #{tpu_custom_call.1} parent=1 // pred_region
      %s38 = ssub.s32 128, 128
      %39 = vsyncadd [#allocation6], %s38
      %s41 = sshll.u32 [#allocation7], 4
      %s42 = int_to_ptr.vmem [resolvable:$true] %s41
      %44 = dma.hbm_to_vmem [thread:$0]  %s2, 128, %s42, [#allocation6]
    $region13: #{tpu_custom_call.1} parent=1 // pred_fallthru
      _
    // Predicated region
    $region14: #{tpu_custom_call.1} parent=1 // pred_check
      _
    $region15: #{tpu_custom_call.1} parent=1 // pred_check_branch
      %46 = sbr.rel (0) target = $region17
    $region16: #{tpu_custom_call.1} parent=1 // pred_region
      %47 = dma.done [#allocation3], 16384
    $region17: #{tpu_custom_call.1} parent=1 // pred_fallthru
      _
    // Predicated region
    $region18: #{tpu_custom_call.1} parent=1 // pred_check
      _
    $region19: #{tpu_custom_call.1} parent=1 // pred_check_branch
      %49 = sbr.rel (0) target = $region21
    $region20: #{tpu_custom_call.1} parent=1 // pred_region
      %50 = dma.done [#allocation6], 6144
    $region21: #{tpu_custom_call.1} parent=1 // pred_fallthru
      _
    // Predicated region
    $region22: #{tpu_custom_call.1} parent=1 // pred_check
      _
    $region23: #{tpu_custom_call.1} parent=1 // pred_check_branch
      %52 = sbr.rel (0) target = $region25
    $region24: #{tpu_custom_call.1} parent=1 // pred_region
      %53 = dma.done [#allocation6], 128
    $region25: #{tpu_custom_call.1} parent=1 // pred_fallthru
      _
    %v55 = vld [vmem:[#allocation2] sm:$0xff]
    %v56 = vld [vmem:[#allocation2 + $0x8] sm:$0xff]
    %v57 = vld [vmem:[#allocation2 + $0x10] sm:$0xff]
    %v58 = vld [vmem:[#allocation2 + $0x18] sm:$0xff]
    %v59 = vld [vmem:[#allocation2 + $0x20] sm:$0xff]
    %v60 = vld [vmem:[#allocation2 + $0x28] sm:$0xff]
    %v61 = vld [vmem:[#allocation2 + $0x30] sm:$0xff]
    %v62 = vld [vmem:[#allocation2 + $0x38] sm:$0xff]
    %v63 = vld [vmem:[#allocation2 + $0x40] sm:$0xff]
    %v64 = vld [vmem:[#allocation2 + $0x48] sm:$0xff]
    %v65 = vld [vmem:[#allocation2 + $0x50] sm:$0xff]
    %v66 = vld [vmem:[#allocation2 + $0x58] sm:$0xff]
    %v67 = vld [vmem:[#allocation2 + $0x60] sm:$0xff]
    %v68 = vld [vmem:[#allocation2 + $0x68] sm:$0xff]
    %v69 = vld [vmem:[#allocation2 + $0x70] sm:$0xff]
    %v70 = vld [vmem:[#allocation2 + $0x78] sm:$0xff]
    %v71 = vld [vmem:[#allocation2 + $0x80] sm:$0xff]
    %v72 = vld [vmem:[#allocation2 + $0x88] sm:$0xff]
    %v73 = vld [vmem:[#allocation2 + $0x90] sm:$0xff]
    %v74 = vld [vmem:[#allocation2 + $0x98] sm:$0xff]
    %v75 = vld [vmem:[#allocation2 + $0xa0] sm:$0xff]
    %v76 = vld [vmem:[#allocation2 + $0xa8] sm:$0xff]
    %v77 = vld [vmem:[#allocation2 + $0xb0] sm:$0xff]
    %v78 = vld [vmem:[#allocation2 + $0xb8] sm:$0xff]
    %v79 = vld [vmem:[#allocation2 + $0xc0] sm:$0xff]
    %v80 = vld [vmem:[#allocation2 + $0xc8] sm:$0xff]
    %v81 = vld [vmem:[#allocation2 + $0xd0] sm:$0xff]
    %v82 = vld [vmem:[#allocation2 + $0xd8] sm:$0xff]
    %v83 = vld [vmem:[#allocation2 + $0xe0] sm:$0xff]
    %v84 = vld [vmem:[#allocation2 + $0xe8] sm:$0xff]
    %v85 = vld [vmem:[#allocation2 + $0xf0] sm:$0xff]
    %v86 = vld [vmem:[#allocation2 + $0xf8] sm:$0xff]
    %v87 = vld [vmem:[#allocation2 + $0x100] sm:$0xff]
    %v88 = vld [vmem:[#allocation2 + $0x108] sm:$0xff]
    %v89 = vld [vmem:[#allocation2 + $0x110] sm:$0xff]
    %v90 = vld [vmem:[#allocation2 + $0x118] sm:$0xff]
    %v91 = vld [vmem:[#allocation2 + $0x120] sm:$0xff]
    %v92 = vld [vmem:[#allocation2 + $0x128] sm:$0xff]
    %v93 = vld [vmem:[#allocation2 + $0x130] sm:$0xff]
    %v94 = vld [vmem:[#allocation2 + $0x138] sm:$0xff]
    %v95 = vld [vmem:[#allocation2 + $0x140] sm:$0xff]
    %v96 = vld [vmem:[#allocation2 + $0x148] sm:$0xff]
    %v97 = vld [vmem:[#allocation2 + $0x150] sm:$0xff]
    %v98 = vld [vmem:[#allocation2 + $0x158] sm:$0xff]
    %v99 = vld [vmem:[#allocation2 + $0x160] sm:$0xff]
    %v100 = vld [vmem:[#allocation2 + $0x168] sm:$0xff]
    %v101 = vld [vmem:[#allocation2 + $0x170] sm:$0xff]
    %v102 = vld [vmem:[#allocation2 + $0x178] sm:$0xff]
    %v103 = vld [vmem:[#allocation2 + $0x180] sm:$0xff]
    %v104 = vld [vmem:[#allocation2 + $0x188] sm:$0xff]
    %v105 = vld [vmem:[#allocation2 + $0x190] sm:$0xff]
    %v106 = vld [vmem:[#allocation2 + $0x198] sm:$0xff]
    %v107 = vld [vmem:[#allocation2 + $0x1a0] sm:$0xff]
    %v108 = vld [vmem:[#allocation2 + $0x1a8] sm:$0xff]
    %v109 = vld [vmem:[#allocation2 + $0x1b0] sm:$0xff]
    %v110 = vld [vmem:[#allocation2 + $0x1b8] sm:$0xff]
    %v111 = vld [vmem:[#allocation2 + $0x1c0] sm:$0xff]
    %v112 = vld [vmem:[#allocation2 + $0x1c8] sm:$0xff]
    %v113 = vld [vmem:[#allocation2 + $0x1d0] sm:$0xff]
    %v114 = vld [vmem:[#allocation2 + $0x1d8] sm:$0xff]
    %v115 = vld [vmem:[#allocation2 + $0x1e0] sm:$0xff]
    %v116 = vld [vmem:[#allocation2 + $0x1e8] sm:$0xff]
    %v117 = vld [vmem:[#allocation2 + $0x1f0] sm:$0xff]
    %v118 = vld [vmem:[#allocation2 + $0x1f8] sm:$0xff]
    %v119 = vld [vmem:[#allocation2 + $0x200] sm:$0xff]
    %v120 = vld [vmem:[#allocation2 + $0x208] sm:$0xff]
    %v121 = vld [vmem:[#allocation2 + $0x210] sm:$0xff]
    %v122 = vld [vmem:[#allocation2 + $0x218] sm:$0xff]
    %v123 = vld [vmem:[#allocation2 + $0x220] sm:$0xff]
    %v124 = vld [vmem:[#allocation2 + $0x228] sm:$0xff]
    %v125 = vld [vmem:[#allocation2 + $0x230] sm:$0xff]
    %v126 = vld [vmem:[#allocation2 + $0x238] sm:$0xff]
    %v127 = vld [vmem:[#allocation2 + $0x240] sm:$0xff]
    %v128 = vld [vmem:[#allocation2 + $0x248] sm:$0xff]
    %v129 = vld [vmem:[#allocation2 + $0x250] sm:$0xff]
    %v130 = vld [vmem:[#allocation2 + $0x258] sm:$0xff]
    %v131 = vld [vmem:[#allocation2 + $0x260] sm:$0xff]
    %v132 = vld [vmem:[#allocation2 + $0x268] sm:$0xff]
    %v133 = vld [vmem:[#allocation2 + $0x270] sm:$0xff]
    %v134 = vld [vmem:[#allocation2 + $0x278] sm:$0xff]
    %v135 = vld [vmem:[#allocation2 + $0x280] sm:$0xff]
    %v136 = vld [vmem:[#allocation2 + $0x288] sm:$0xff]
    %v137 = vld [vmem:[#allocation2 + $0x290] sm:$0xff]
    %v138 = vld [vmem:[#allocation2 + $0x298] sm:$0xff]
    %v139 = vld [vmem:[#allocation2 + $0x2a0] sm:$0xff]
    %v140 = vld [vmem:[#allocation2 + $0x2a8] sm:$0xff]
    %v141 = vld [vmem:[#allocation2 + $0x2b0] sm:$0xff]
    %v142 = vld [vmem:[#allocation2 + $0x2b8] sm:$0xff]
    %v143 = vld [vmem:[#allocation2 + $0x2c0] sm:$0xff]
    %v144 = vld [vmem:[#allocation2 + $0x2c8] sm:$0xff]
    %v145 = vld [vmem:[#allocation2 + $0x2d0] sm:$0xff]
    %v146 = vld [vmem:[#allocation2 + $0x2d8] sm:$0xff]
    %v147 = vld [vmem:[#allocation2 + $0x2e0] sm:$0xff]
    %v148 = vld [vmem:[#allocation2 + $0x2e8] sm:$0xff]
    %v149 = vld [vmem:[#allocation2 + $0x2f0] sm:$0xff]
    %v150 = vld [vmem:[#allocation2 + $0x2f8] sm:$0xff]
    %v151 = vld [vmem:[#allocation2 + $0x300] sm:$0xff]
    %v152 = vld [vmem:[#allocation2 + $0x308] sm:$0xff]
    %v153 = vld [vmem:[#allocation2 + $0x310] sm:$0xff]
    %v154 = vld [vmem:[#allocation2 + $0x318] sm:$0xff]
    %v155 = vld [vmem:[#allocation2 + $0x320] sm:$0xff]
    %v156 = vld [vmem:[#allocation2 + $0x328] sm:$0xff]
    %v157 = vld [vmem:[#allocation2 + $0x330] sm:$0xff]
    %v158 = vld [vmem:[#allocation2 + $0x338] sm:$0xff]
    %v159 = vld [vmem:[#allocation2 + $0x340] sm:$0xff]
    %v160 = vld [vmem:[#allocation2 + $0x348] sm:$0xff]
    %v161 = vld [vmem:[#allocation2 + $0x350] sm:$0xff]
    %v162 = vld [vmem:[#allocation2 + $0x358] sm:$0xff]
    %v163 = vld [vmem:[#allocation2 + $0x360] sm:$0xff]
    %v164 = vld [vmem:[#allocation2 + $0x368] sm:$0xff]
    %v165 = vld [vmem:[#allocation2 + $0x370] sm:$0xff]
    %v166 = vld [vmem:[#allocation2 + $0x378] sm:$0xff]
    %v167 = vld [vmem:[#allocation2 + $0x380] sm:$0xff]
    %v168 = vld [vmem:[#allocation2 + $0x388] sm:$0xff]
    %v169 = vld [vmem:[#allocation2 + $0x390] sm:$0xff]
    %v170 = vld [vmem:[#allocation2 + $0x398] sm:$0xff]
    %v171 = vld [vmem:[#allocation2 + $0x3a0] sm:$0xff]
    %v172 = vld [vmem:[#allocation2 + $0x3a8] sm:$0xff]
    %v173 = vld [vmem:[#allocation2 + $0x3b0] sm:$0xff]
    %v174 = vld [vmem:[#allocation2 + $0x3b8] sm:$0xff]
    %v175 = vld [vmem:[#allocation2 + $0x3c0] sm:$0xff]
    %v176 = vld [vmem:[#allocation2 + $0x3c8] sm:$0xff]
    %v177 = vld [vmem:[#allocation2 + $0x3d0] sm:$0xff]
    %v178 = vld [vmem:[#allocation2 + $0x3d8] sm:$0xff]
    %v179 = vld [vmem:[#allocation2 + $0x3e0] sm:$0xff]
    %v180 = vld [vmem:[#allocation2 + $0x3e8] sm:$0xff]
    %v181 = vld [vmem:[#allocation2 + $0x3f0] sm:$0xff]
    %v182 = vld [vmem:[#allocation2 + $0x3f8] sm:$0xff]
    %v183 = vpack.c.bf16 %v57, %v55
    %v184 = vpack.c.bf16 %v58, %v56
    %v185 = vpack.c.bf16 %v61, %v59
    %v186 = vpack.c.bf16 %v62, %v60
    %v187 = vpack.c.bf16 %v65, %v63
    %v188 = vpack.c.bf16 %v66, %v64
    %v189 = vpack.c.bf16 %v69, %v67
    %v190 = vpack.c.bf16 %v70, %v68
    %v191 = vpack.c.bf16 %v73, %v71
    %v192 = vpack.c.bf16 %v74, %v72
    %v193 = vpack.c.bf16 %v77, %v75
    %v194 = vpack.c.bf16 %v78, %v76
    %v195 = vpack.c.bf16 %v81, %v79
    %v196 = vpack.c.bf16 %v82, %v80
    %v197 = vpack.c.bf16 %v85, %v83
    %v198 = vpack.c.bf16 %v86, %v84
    %v199 = vpack.c.bf16 %v89, %v87
    %v200 = vpack.c.bf16 %v90, %v88
    %v201 = vpack.c.bf16 %v93, %v91
    %v202 = vpack.c.bf16 %v94, %v92
    %v203 = vpack.c.bf16 %v97, %v95
    %v204 = vpack.c.bf16 %v98, %v96
    %v205 = vpack.c.bf16 %v101, %v99
    %v206 = vpack.c.bf16 %v102, %v100
    %v207 = vpack.c.bf16 %v105, %v103
    %v208 = vpack.c.bf16 %v106, %v104
    %v209 = vpack.c.bf16 %v109, %v107
    %v210 = vpack.c.bf16 %v110, %v108
    %v211 = vpack.c.bf16 %v113, %v111
    %v212 = vpack.c.bf16 %v114, %v112
    %v213 = vpack.c.bf16 %v117, %v115
    %v214 = vpack.c.bf16 %v118, %v116
    %v215 = vpack.c.bf16 %v121, %v119
    %v216 = vpack.c.bf16 %v122, %v120
    %v217 = vpack.c.bf16 %v125, %v123
    %v218 = vpack.c.bf16 %v126, %v124
    %v219 = vpack.c.bf16 %v129, %v127
    %v220 = vpack.c.bf16 %v130, %v128
    %v221 = vpack.c.bf16 %v133, %v131
    %v222 = vpack.c.bf16 %v134, %v132
    %v223 = vpack.c.bf16 %v137, %v135
    %v224 = vpack.c.bf16 %v138, %v136
    %v225 = vpack.c.bf16 %v141, %v139
    %v226 = vpack.c.bf16 %v142, %v140
    %v227 = vpack.c.bf16 %v145, %v143
    %v228 = vpack.c.bf16 %v146, %v144
    %v229 = vpack.c.bf16 %v149, %v147
    %v230 = vpack.c.bf16 %v150, %v148
    %v231 = vpack.c.bf16 %v153, %v151
    %v232 = vpack.c.bf16 %v154, %v152
    %v233 = vpack.c.bf16 %v157, %v155
    %v234 = vpack.c.bf16 %v158, %v156
    %v235 = vpack.c.bf16 %v161, %v159
    %v236 = vpack.c.bf16 %v162, %v160
    %v237 = vpack.c.bf16 %v165, %v163
    %v238 = vpack.c.bf16 %v166, %v164
    %v239 = vpack.c.bf16 %v169, %v167
    %v240 = vpack.c.bf16 %v170, %v168
    %v241 = vpack.c.bf16 %v173, %v171
    %v242 = vpack.c.bf16 %v174, %v172
    %v243 = vpack.c.bf16 %v177, %v175
    %v244 = vpack.c.bf16 %v178, %v176
    %v245 = vpack.c.bf16 %v181, %v179
    %v246 = vpack.c.bf16 %v182, %v180
    %v247 = vld [vmem:[#allocation5] sm:$0xf]
    %v248 = vld [vmem:[#allocation5 + $0x4] sm:$0xf]
    %v249 = vld [vmem:[#allocation5 + $0x8] sm:$0xf]
    %v250 = vld [vmem:[#allocation5 + $0xc] sm:$0xf]
    %v251 = vld [vmem:[#allocation5 + $0x10] sm:$0xf]
    %v252 = vld [vmem:[#allocation5 + $0x14] sm:$0xf]
    %v253 = vld [vmem:[#allocation5 + $0x18] sm:$0xf]
    %v254 = vld [vmem:[#allocation5 + $0x1c] sm:$0xf]
    %v255 = vld [vmem:[#allocation5 + $0x20] sm:$0xf]
    %v256 = vld [vmem:[#allocation5 + $0x24] sm:$0xf]
    %v257 = vld [vmem:[#allocation5 + $0x28] sm:$0xf]
    %v258 = vld [vmem:[#allocation5 + $0x2c] sm:$0xf]
    %v259 = vld [vmem:[#allocation5 + $0x30] sm:$0xf]
    %v260 = vld [vmem:[#allocation5 + $0x34] sm:$0xf]
    %v261 = vld [vmem:[#allocation5 + $0x38] sm:$0xf]
    %v262 = vld [vmem:[#allocation5 + $0x3c] sm:$0xf]
    %v263 = vld [vmem:[#allocation5 + $0x40] sm:$0xf]
    %v264 = vld [vmem:[#allocation5 + $0x44] sm:$0xf]
    %v265 = vld [vmem:[#allocation5 + $0x48] sm:$0xf]
    %v266 = vld [vmem:[#allocation5 + $0x4c] sm:$0xf]
    %v267 = vld [vmem:[#allocation5 + $0x50] sm:$0xf]
    %v268 = vld [vmem:[#allocation5 + $0x54] sm:$0xf]
    %v269 = vld [vmem:[#allocation5 + $0x58] sm:$0xf]
    %v270 = vld [vmem:[#allocation5 + $0x5c] sm:$0xf]
    %v271 = vld [vmem:[#allocation5 + $0x60] sm:$0xf]
    %v272 = vld [vmem:[#allocation5 + $0x64] sm:$0xf]
    %v273 = vld [vmem:[#allocation5 + $0x68] sm:$0xf]
    %v274 = vld [vmem:[#allocation5 + $0x6c] sm:$0xf]
    %v275 = vld [vmem:[#allocation5 + $0x70] sm:$0xf]
    %v276 = vld [vmem:[#allocation5 + $0x74] sm:$0xf]
    %v277 = vld [vmem:[#allocation5 + $0x78] sm:$0xf]
    %v278 = vld [vmem:[#allocation5 + $0x7c] sm:$0xf]
    %v279 = vld [vmem:[#allocation7] sm:$0x1]
    %v280 = vlaneseq
    %v281 = vshrl.u32 %v280, 7
    %v282 = vsub.s32 0, %v281
    %v283 = vrot.slane %v279, %v282
    %v316 = vunpack.c.l.b16 %v247
    %v317 = vunpack.c.l.b16 %v248
    %v318 = vunpack.c.l.b16 %v249
    %v319 = vunpack.c.l.b16 %v250
    %v320 = vunpack.c.l.b16 %v251
    %v321 = vunpack.c.l.b16 %v252
    %v322 = vunpack.c.l.b16 %v253
    %v323 = vunpack.c.l.b16 %v254
    %v324 = vunpack.c.l.b16 %v255
    %v325 = vunpack.c.l.b16 %v256
    %v326 = vunpack.c.l.b16 %v257
    %v327 = vunpack.c.l.b16 %v258
    %v328 = vunpack.c.l.b16 %v259
    %v329 = vunpack.c.l.b16 %v260
    %v330 = vunpack.c.l.b16 %v261
    %v331 = vunpack.c.l.b16 %v262
    %v332 = vunpack.c.l.b16 %v263
    %v333 = vunpack.c.l.b16 %v264
    %v334 = vunpack.c.l.b16 %v265
    %v335 = vunpack.c.l.b16 %v266
    %v336 = vunpack.c.l.b16 %v267
    %v337 = vunpack.c.l.b16 %v268
    %v338 = vunpack.c.l.b16 %v269
    %v339 = vunpack.c.l.b16 %v270
    %v340 = vunpack.c.l.b16 %v271
    %v341 = vunpack.c.l.b16 %v272
    %v342 = vunpack.c.l.b16 %v273
    %v343 = vunpack.c.l.b16 %v274
    %v344 = vunpack.c.l.b16 %v275
    %v345 = vunpack.c.l.b16 %v276
    %v346 = vunpack.c.l.b16 %v277
    %v347 = vunpack.c.l.b16 %v278
    %v348 = vpack.c.b16 %v317, %v316
    %v349 = vpack.c.b16 %v319, %v318
    %v350 = vpack.c.b16 %v321, %v320
    %v351 = vpack.c.b16 %v323, %v322
    %v352 = vpack.c.b16 %v325, %v324
    %v353 = vpack.c.b16 %v327, %v326
    %v354 = vpack.c.b16 %v329, %v328
    %v355 = vpack.c.b16 %v331, %v330
    %v356 = vpack.c.b16 %v333, %v332
    %v357 = vpack.c.b16 %v335, %v334
    %v358 = vpack.c.b16 %v337, %v336
    %v359 = vpack.c.b16 %v339, %v338
    %v360 = vpack.c.b16 %v341, %v340
    %v361 = vpack.c.b16 %v343, %v342
    %v362 = vpack.c.b16 %v345, %v344
    %v363 = vpack.c.b16 %v347, %v346
    %380 = vmatprep.subr.bf16.mxu0 0
    %381 = vmatpush1.bf16.msra.mxu0 %v355
    %382 = vmatprep.subr.bf16.mxu0 0
    %383 = vmatpush1.bf16.msra.mxu0 %v354
    %384 = vmatprep.subr.bf16.mxu0 0
    %385 = vmatpush1.bf16.msra.mxu0 %v353
    %386 = vmatprep.subr.bf16.mxu0 0
    %387 = vmatpush1.bf16.msra.mxu0 %v352
    %388 = vmatprep.subr.bf16.mxu0 0
    %389 = vmatpush1.bf16.msra.mxu0 %v351
    %390 = vmatprep.subr.bf16.mxu0 0
    %391 = vmatpush1.bf16.msra.mxu0 %v350
    %392 = vmatprep.subr.bf16.mxu0 0
    %393 = vmatpush1.bf16.msra.mxu0 %v349
    %394 = vmatprep.subr.bf16.mxu0 0
    %395 = vmatpush1.bf16.msra.mxu0 %v348
    %396 = vmatprep.subr.bf16.mxu0 0
    %397 = vmatpush2.bf16.msra.mxu0 %v363
    %398 = vmatprep.subr.bf16.mxu0 0
    %399 = vmatpush2.bf16.msra.mxu0 %v362
    %400 = vmatprep.subr.bf16.mxu0 0
    %401 = vmatpush2.bf16.msra.mxu0 %v361
    %402 = vmatprep.subr.bf16.mxu0 0
    %403 = vmatpush2.bf16.msra.mxu0 %v360
    %404 = vmatprep.subr.bf16.mxu0 0
    %405 = vmatpush2.bf16.msra.mxu0 %v359
    %406 = vmatprep.subr.bf16.mxu0 0
    %407 = vmatpush2.bf16.msra.mxu0 %v358
    %408 = vmatprep.subr.bf16.mxu0 0
    %409 = vmatpush2.bf16.msra.mxu0 %v357
    %410 = vmatprep.subr.bf16.mxu0 0
    %411 = vmatpush2.bf16.msra.mxu0 %v356
    %412 = vmatprep.mubr.bf16.mxu0 %v184
    %413 = vmatmul.mubr.bf16.gmra.mxu0 %v183
    %v414 = vpop.f32.mrf.mxu0
    %v415 = vadd.f32 %v283, %v414
    %v416 = vpop.f32.mrf.mxu0
    %v417 = vpop.f32.mrf.mxu0
    %v418 = vadd.f32 %v283, %v417
    %v419 = vpop.f32.mrf.mxu0
    %420 = vmatprep.mubr.bf16.mxu0 %v186
    %421 = vmatmul.mubr.bf16.gmra.mxu0 %v185
    %v422 = vpop.f32.mrf.mxu0
    %v423 = vadd.f32 %v283, %v422
    %v424 = vpop.f32.mrf.mxu0
    %v425 = vpop.f32.mrf.mxu0
    %v426 = vadd.f32 %v283, %v425
    %v427 = vpop.f32.mrf.mxu0
    %428 = vmatprep.mubr.bf16.mxu0 %v188
    %429 = vmatmul.mubr.bf16.gmra.mxu0 %v187
    %v430 = vpop.f32.mrf.mxu0
    %v431 = vadd.f32 %v283, %v430
    %v432 = vpop.f32.mrf.mxu0
    %v433 = vpop.f32.mrf.mxu0
    %v434 = vadd.f32 %v283, %v433
    %v435 = vpop.f32.mrf.mxu0
    %436 = vmatprep.mubr.bf16.mxu0 %v190
    %437 = vmatmul.mubr.bf16.gmra.mxu0 %v189
    %v438 = vpop.f32.mrf.mxu0
    %v439 = vadd.f32 %v283, %v438
    %v440 = vpop.f32.mrf.mxu0
    %v441 = vpop.f32.mrf.mxu0
    %v442 = vadd.f32 %v283, %v441
    %v443 = vpop.f32.mrf.mxu0
    %444 = vmatprep.mubr.bf16.mxu0 %v192
    %445 = vmatmul.mubr.bf16.gmra.mxu0 %v191
    %v446 = vpop.f32.mrf.mxu0
    %v447 = vadd.f32 %v283, %v446
    %v448 = vpop.f32.mrf.mxu0
    %v449 = vpop.f32.mrf.mxu0
    %v450 = vadd.f32 %v283, %v449
    %v451 = vpop.f32.mrf.mxu0
    %452 = vmatprep.mubr.bf16.mxu0 %v194
    %453 = vmatmul.mubr.bf16.gmra.mxu0 %v193
    %v454 = vpop.f32.mrf.mxu0
    %v455 = vadd.f32 %v283, %v454
    %v456 = vpop.f32.mrf.mxu0
    %v457 = vpop.f32.mrf.mxu0
    %v458 = vadd.f32 %v283, %v457
    %v459 = vpop.f32.mrf.mxu0
    %460 = vmatprep.mubr.bf16.mxu0 %v196
    %461 = vmatmul.mubr.bf16.gmra.mxu0 %v195
    %v462 = vpop.f32.mrf.mxu0
    %v463 = vadd.f32 %v283, %v462
    %v464 = vpop.f32.mrf.mxu0
    %v465 = vpop.f32.mrf.mxu0
    %v466 = vadd.f32 %v283, %v465
    %v467 = vpop.f32.mrf.mxu0
    %468 = vmatprep.mubr.bf16.mxu0 %v198
    %469 = vmatmul.mubr.bf16.gmra.mxu0 %v197
    %v470 = vpop.f32.mrf.mxu0
    %v471 = vadd.f32 %v283, %v470
    %v472 = vpop.f32.mrf.mxu0
    %v473 = vpop.f32.mrf.mxu0
    %v474 = vadd.f32 %v283, %v473
    %v475 = vpop.f32.mrf.mxu0
    %476 = vmatprep.mubr.bf16.mxu0 %v200
    %477 = vmatmul.mubr.bf16.gmra.mxu0 %v199
    %v478 = vpop.f32.mrf.mxu0
    %v479 = vadd.f32 %v283, %v478
    %v480 = vpop.f32.mrf.mxu0
    %v481 = vpop.f32.mrf.mxu0
    %v482 = vadd.f32 %v283, %v481
    %v483 = vpop.f32.mrf.mxu0
    %484 = vmatprep.mubr.bf16.mxu0 %v202
    %485 = vmatmul.mubr.bf16.gmra.mxu0 %v201
    %v486 = vpop.f32.mrf.mxu0
    %v487 = vadd.f32 %v283, %v486
    %v488 = vpop.f32.mrf.mxu0
    %v489 = vpop.f32.mrf.mxu0
    %v490 = vadd.f32 %v283, %v489
    %v491 = vpop.f32.mrf.mxu0
    %492 = vmatprep.mubr.bf16.mxu0 %v204
    %493 = vmatmul.mubr.bf16.gmra.mxu0 %v203
    %v494 = vpop.f32.mrf.mxu0
    %v495 = vadd.f32 %v283, %v494
    %v496 = vpop.f32.mrf.mxu0
    %v497 = vpop.f32.mrf.mxu0
    %v498 = vadd.f32 %v283, %v497
    %v499 = vpop.f32.mrf.mxu0
    %500 = vmatprep.mubr.bf16.mxu0 %v206
    %501 = vmatmul.mubr.bf16.gmra.mxu0 %v205
    %v502 = vpop.f32.mrf.mxu0
    %v503 = vadd.f32 %v283, %v502
    %v504 = vpop.f32.mrf.mxu0
    %v505 = vpop.f32.mrf.mxu0
    %v506 = vadd.f32 %v283, %v505
    %v507 = vpop.f32.mrf.mxu0
    %508 = vmatprep.mubr.bf16.mxu0 %v208
    %509 = vmatmul.mubr.bf16.gmra.mxu0 %v207
    %v510 = vpop.f32.mrf.mxu0
    %v511 = vadd.f32 %v283, %v510
    %v512 = vpop.f32.mrf.mxu0
    %v513 = vpop.f32.mrf.mxu0
    %v514 = vadd.f32 %v283, %v513
    %v515 = vpop.f32.mrf.mxu0
    %516 = vmatprep.mubr.bf16.mxu0 %v210
    %517 = vmatmul.mubr.bf16.gmra.mxu0 %v209
    %v518 = vpop.f32.mrf.mxu0
    %v519 = vadd.f32 %v283, %v518
    %v520 = vpop.f32.mrf.mxu0
    %v521 = vpop.f32.mrf.mxu0
    %v522 = vadd.f32 %v283, %v521
    %v523 = vpop.f32.mrf.mxu0
    %524 = vmatprep.mubr.bf16.mxu0 %v212
    %525 = vmatmul.mubr.bf16.gmra.mxu0 %v211
    %v526 = vpop.f32.mrf.mxu0
    %v527 = vadd.f32 %v283, %v526
    %v528 = vpop.f32.mrf.mxu0
    %v529 = vpop.f32.mrf.mxu0
    %v530 = vadd.f32 %v283, %v529
    %v531 = vpop.f32.mrf.mxu0
    %532 = vmatprep.mubr.bf16.mxu0 %v214
    %533 = vmatmul.mubr.bf16.gmra.mxu0 %v213
    %v534 = vpop.f32.mrf.mxu0
    %v535 = vadd.f32 %v283, %v534
    %v536 = vpop.f32.mrf.mxu0
    %v537 = vpop.f32.mrf.mxu0
    %v538 = vadd.f32 %v283, %v537
    %v539 = vpop.f32.mrf.mxu0
    %540 = vmatprep.mubr.bf16.mxu0 %v216
    %541 = vmatmul.mubr.bf16.gmra.mxu0 %v215
    %v542 = vpop.f32.mrf.mxu0
    %v543 = vadd.f32 %v283, %v542
    %v544 = vpop.f32.mrf.mxu0
    %v545 = vpop.f32.mrf.mxu0
    %v546 = vadd.f32 %v283, %v545
    %v547 = vpop.f32.mrf.mxu0
    %548 = vmatprep.mubr.bf16.mxu0 %v218
    %549 = vmatmul.mubr.bf16.gmra.mxu0 %v217
    %v550 = vpop.f32.mrf.mxu0
    %v551 = vadd.f32 %v283, %v550
    %v552 = vpop.f32.mrf.mxu0
    %v553 = vpop.f32.mrf.mxu0
    %v554 = vadd.f32 %v283, %v553
    %v555 = vpop.f32.mrf.mxu0
    %556 = vmatprep.mubr.bf16.mxu0 %v220
    %557 = vmatmul.mubr.bf16.gmra.mxu0 %v219
    %v558 = vpop.f32.mrf.mxu0
    %v559 = vadd.f32 %v283, %v558
    %v560 = vpop.f32.mrf.mxu0
    %v561 = vpop.f32.mrf.mxu0
    %v562 = vadd.f32 %v283, %v561
    %v563 = vpop.f32.mrf.mxu0
    %564 = vmatprep.mubr.bf16.mxu0 %v222
    %565 = vmatmul.mubr.bf16.gmra.mxu0 %v221
    %v566 = vpop.f32.mrf.mxu0
    %v567 = vadd.f32 %v283, %v566
    %v568 = vpop.f32.mrf.mxu0
    %v569 = vpop.f32.mrf.mxu0
    %v570 = vadd.f32 %v283, %v569
    %v571 = vpop.f32.mrf.mxu0
    %572 = vmatprep.mubr.bf16.mxu0 %v224
    %573 = vmatmul.mubr.bf16.gmra.mxu0 %v223
    %v574 = vpop.f32.mrf.mxu0
    %v575 = vadd.f32 %v283, %v574
    %v576 = vpop.f32.mrf.mxu0
    %v577 = vpop.f32.mrf.mxu0
    %v578 = vadd.f32 %v283, %v577
    %v579 = vpop.f32.mrf.mxu0
    %580 = vmatprep.mubr.bf16.mxu0 %v226
    %581 = vmatmul.mubr.bf16.gmra.mxu0 %v225
    %v582 = vpop.f32.mrf.mxu0
    %v583 = vadd.f32 %v283, %v582
    %v584 = vpop.f32.mrf.mxu0
    %v585 = vpop.f32.mrf.mxu0
    %v586 = vadd.f32 %v283, %v585
    %v587 = vpop.f32.mrf.mxu0
    %588 = vmatprep.mubr.bf16.mxu0 %v228
    %589 = vmatmul.mubr.bf16.gmra.mxu0 %v227
    %v590 = vpop.f32.mrf.mxu0
    %v591 = vadd.f32 %v283, %v590
    %v592 = vpop.f32.mrf.mxu0
    %v593 = vpop.f32.mrf.mxu0
    %v594 = vadd.f32 %v283, %v593
    %v595 = vpop.f32.mrf.mxu0
    %596 = vmatprep.mubr.bf16.mxu0 %v230
    %597 = vmatmul.mubr.bf16.gmra.mxu0 %v229
    %v598 = vpop.f32.mrf.mxu0
    %v599 = vadd.f32 %v283, %v598
    %v600 = vpop.f32.mrf.mxu0
    %v601 = vpop.f32.mrf.mxu0
    %v602 = vadd.f32 %v283, %v601
    %v603 = vpop.f32.mrf.mxu0
    %604 = vmatprep.mubr.bf16.mxu0 %v232
    %605 = vmatmul.mubr.bf16.gmra.mxu0 %v231
    %v606 = vpop.f32.mrf.mxu0
    %v607 = vadd.f32 %v283, %v606
    %v608 = vpop.f32.mrf.mxu0
    %v609 = vpop.f32.mrf.mxu0
    %v610 = vadd.f32 %v283, %v609
    %v611 = vpop.f32.mrf.mxu0
    %612 = vmatprep.mubr.bf16.mxu0 %v234
    %613 = vmatmul.mubr.bf16.gmra.mxu0 %v233
    %v614 = vpop.f32.mrf.mxu0
    %v615 = vadd.f32 %v283, %v614
    %v616 = vpop.f32.mrf.mxu0
    %v617 = vpop.f32.mrf.mxu0
    %v618 = vadd.f32 %v283, %v617
    %v619 = vpop.f32.mrf.mxu0
    %620 = vmatprep.mubr.bf16.mxu0 %v236
    %621 = vmatmul.mubr.bf16.gmra.mxu0 %v235
    %v622 = vpop.f32.mrf.mxu0
    %v623 = vadd.f32 %v283, %v622
    %v624 = vpop.f32.mrf.mxu0
    %v625 = vpop.f32.mrf.mxu0
    %v626 = vadd.f32 %v283, %v625
    %v627 = vpop.f32.mrf.mxu0
    %628 = vmatprep.mubr.bf16.mxu0 %v238
    %629 = vmatmul.mubr.bf16.gmra.mxu0 %v237
    %v630 = vpop.f32.mrf.mxu0
    %v631 = vadd.f32 %v283, %v630
    %v632 = vpop.f32.mrf.mxu0
    %v633 = vpop.f32.mrf.mxu0
    %v634 = vadd.f32 %v283, %v633
    %v635 = vpop.f32.mrf.mxu0
    %636 = vmatprep.mubr.bf16.mxu0 %v240
    %637 = vmatmul.mubr.bf16.gmra.mxu0 %v239
    %v638 = vpop.f32.mrf.mxu0
    %v639 = vadd.f32 %v283, %v638
    %v640 = vpop.f32.mrf.mxu0
    %v641 = vpop.f32.mrf.mxu0
    %v642 = vadd.f32 %v283, %v641
    %v643 = vpop.f32.mrf.mxu0
    %644 = vmatprep.mubr.bf16.mxu0 %v242
    %645 = vmatmul.mubr.bf16.gmra.mxu0 %v241
    %v646 = vpop.f32.mrf.mxu0
    %v647 = vadd.f32 %v283, %v646
    %v648 = vpop.f32.mrf.mxu0
    %v649 = vpop.f32.mrf.mxu0
    %v650 = vadd.f32 %v283, %v649
    %v651 = vpop.f32.mrf.mxu0
    %652 = vmatprep.mubr.bf16.mxu0 %v244
    %653 = vmatmul.mubr.bf16.gmra.mxu0 %v243
    %v654 = vpop.f32.mrf.mxu0
    %v655 = vadd.f32 %v283, %v654
    %v656 = vpop.f32.mrf.mxu0
    %v657 = vpop.f32.mrf.mxu0
    %v658 = vadd.f32 %v283, %v657
    %v659 = vpop.f32.mrf.mxu0
    %660 = vmatprep.mubr.bf16.mxu0 %v246
    %661 = vmatmul.mubr.bf16.gmra.mxu0 %v245
    %v662 = vpop.f32.mrf.mxu0
    %v663 = vadd.f32 %v283, %v662
    %v664 = vpop.f32.mrf.mxu0
    %v665 = vpop.f32.mrf.mxu0
    %v666 = vadd.f32 %v283, %v665
    %v667 = vpop.f32.mrf.mxu0
    %668 = vdwg.mxu0
    %v669 = vmax.f32 %v415, 0.0
    %v670 = vmax.f32 %v418, 0.0
    %v671 = vmax.f32 %v423, 0.0
    %v672 = vmax.f32 %v426, 0.0
    %v673 = vmax.f32 %v431, 0.0
    %v674 = vmax.f32 %v434, 0.0
    %v675 = vmax.f32 %v439, 0.0
    %v676 = vmax.f32 %v442, 0.0
    %v677 = vmax.f32 %v447, 0.0
    %v678 = vmax.f32 %v450, 0.0
    %v679 = vmax.f32 %v455, 0.0
    %v680 = vmax.f32 %v458, 0.0
    %v681 = vmax.f32 %v463, 0.0
    %v682 = vmax.f32 %v466, 0.0
    %v683 = vmax.f32 %v471, 0.0
    %v684 = vmax.f32 %v474, 0.0
    %v685 = vmax.f32 %v479, 0.0
    %v686 = vmax.f32 %v482, 0.0
    %v687 = vmax.f32 %v487, 0.0
    %v688 = vmax.f32 %v490, 0.0
    %v689 = vmax.f32 %v495, 0.0
    %v690 = vmax.f32 %v498, 0.0
    %v691 = vmax.f32 %v503, 0.0
    %v692 = vmax.f32 %v506, 0.0
    %v693 = vmax.f32 %v511, 0.0
    %v694 = vmax.f32 %v514, 0.0
    %v695 = vmax.f32 %v519, 0.0
    %v696 = vmax.f32 %v522, 0.0
    %v697 = vmax.f32 %v527, 0.0
    %v698 = vmax.f32 %v530, 0.0
    %v699 = vmax.f32 %v535, 0.0
    %v700 = vmax.f32 %v538, 0.0
    %v701 = vmax.f32 %v543, 0.0
    %v702 = vmax.f32 %v546, 0.0
    %v703 = vmax.f32 %v551, 0.0
    %v704 = vmax.f32 %v554, 0.0
    %v705 = vmax.f32 %v559, 0.0
    %v706 = vmax.f32 %v562, 0.0
    %v707 = vmax.f32 %v567, 0.0
    %v708 = vmax.f32 %v570, 0.0
    %v709 = vmax.f32 %v575, 0.0
    %v710 = vmax.f32 %v578, 0.0
    %v711 = vmax.f32 %v583, 0.0
    %v712 = vmax.f32 %v586, 0.0
    %v713 = vmax.f32 %v591, 0.0
    %v714 = vmax.f32 %v594, 0.0
    %v715 = vmax.f32 %v599, 0.0
    %v716 = vmax.f32 %v602, 0.0
    %v717 = vmax.f32 %v607, 0.0
    %v718 = vmax.f32 %v610, 0.0
    %v719 = vmax.f32 %v615, 0.0
    %v720 = vmax.f32 %v618, 0.0
    %v721 = vmax.f32 %v623, 0.0
    %v722 = vmax.f32 %v626, 0.0
    %v723 = vmax.f32 %v631, 0.0
    %v724 = vmax.f32 %v634, 0.0
    %v725 = vmax.f32 %v639, 0.0
    %v726 = vmax.f32 %v642, 0.0
    %v727 = vmax.f32 %v647, 0.0
    %v728 = vmax.f32 %v650, 0.0
    %v729 = vmax.f32 %v655, 0.0
    %v730 = vmax.f32 %v658, 0.0
    %v731 = vmax.f32 %v663, 0.0
    %v732 = vmax.f32 %v666, 0.0
    %v733 = vpack.c.bf16 %v670, %v669
    %v734 = vpack.c.bf16 %v672, %v671
    %v735 = vpack.c.bf16 %v674, %v673
    %v736 = vpack.c.bf16 %v676, %v675
    %v737 = vpack.c.bf16 %v678, %v677
    %v738 = vpack.c.bf16 %v680, %v679
    %v739 = vpack.c.bf16 %v682, %v681
    %v740 = vpack.c.bf16 %v684, %v683
    %v741 = vpack.c.bf16 %v686, %v685
    %v742 = vpack.c.bf16 %v688, %v687
    %v743 = vpack.c.bf16 %v690, %v689
    %v744 = vpack.c.bf16 %v692, %v691
    %v745 = vpack.c.bf16 %v694, %v693
    %v746 = vpack.c.bf16 %v696, %v695
    %v747 = vpack.c.bf16 %v698, %v697
    %v748 = vpack.c.bf16 %v700, %v699
    %v749 = vpack.c.bf16 %v702, %v701
    %v750 = vpack.c.bf16 %v704, %v703
    %v751 = vpack.c.bf16 %v706, %v705
    %v752 = vpack.c.bf16 %v708, %v707
    %v753 = vpack.c.bf16 %v710, %v709
    %v754 = vpack.c.bf16 %v712, %v711
    %v755 = vpack.c.bf16 %v714, %v713
    %v756 = vpack.c.bf16 %v716, %v715
    %v757 = vpack.c.bf16 %v718, %v717
    %v758 = vpack.c.bf16 %v720, %v719
    %v759 = vpack.c.bf16 %v722, %v721
    %v760 = vpack.c.bf16 %v724, %v723
    %v761 = vpack.c.bf16 %v726, %v725
    %v762 = vpack.c.bf16 %v728, %v727
    %v763 = vpack.c.bf16 %v730, %v729
    %v764 = vpack.c.bf16 %v732, %v731
    %v765 = vld [vmem:[#allocation5 + $0x80] sm:$0xf]
    %v766 = vld [vmem:[#allocation5 + $0x84] sm:$0xf]
    %v767 = vld [vmem:[#allocation5 + $0x88] sm:$0xf]
    %v768 = vld [vmem:[#allocation5 + $0x8c] sm:$0xf]
    %v769 = vld [vmem:[#allocation5 + $0x90] sm:$0xf]
    %v770 = vld [vmem:[#allocation5 + $0x94] sm:$0xf]
    %v771 = vld [vmem:[#allocation5 + $0x98] sm:$0xf]
    %v772 = vld [vmem:[#allocation5 + $0x9c] sm:$0xf]
    %v773 = vld [vmem:[#allocation5 + $0xa0] sm:$0xf]
    %v774 = vld [vmem:[#allocation5 + $0xa4] sm:$0xf]
    %v775 = vld [vmem:[#allocation5 + $0xa8] sm:$0xf]
    %v776 = vld [vmem:[#allocation5 + $0xac] sm:$0xf]
    %v777 = vld [vmem:[#allocation5 + $0xb0] sm:$0xf]
    %v778 = vld [vmem:[#allocation5 + $0xb4] sm:$0xf]
    %v779 = vld [vmem:[#allocation5 + $0xb8] sm:$0xf]
    %v780 = vld [vmem:[#allocation5 + $0xbc] sm:$0xf]
    %v781 = vld [vmem:[#allocation7 + $0x1] sm:$0x1]
    %v782 = vlaneseq
    %v783 = vshrl.u32 %v782, 7
    %v784 = vsub.s32 0, %v783
    %v785 = vrot.slane %v781, %v784
    %v802 = vunpack.c.l.b16 %v765
    %v803 = vunpack.c.l.b16 %v766
    %v804 = vunpack.c.l.b16 %v767
    %v805 = vunpack.c.l.b16 %v768
    %v806 = vunpack.c.l.b16 %v769
    %v807 = vunpack.c.l.b16 %v770
    %v808 = vunpack.c.l.b16 %v771
    %v809 = vunpack.c.l.b16 %v772
    %v810 = vunpack.c.l.b16 %v773
    %v811 = vunpack.c.l.b16 %v774
    %v812 = vunpack.c.l.b16 %v775
    %v813 = vunpack.c.l.b16 %v776
    %v814 = vunpack.c.l.b16 %v777
    %v815 = vunpack.c.l.b16 %v778
    %v816 = vunpack.c.l.b16 %v779
    %v817 = vunpack.c.l.b16 %v780
    %v818 = vpack.c.b16 %v803, %v802
    %v819 = vpack.c.b16 %v805, %v804
    %v820 = vpack.c.b16 %v807, %v806
    %v821 = vpack.c.b16 %v809, %v808
    %v822 = vpack.c.b16 %v811, %v810
    %v823 = vpack.c.b16 %v813, %v812
    %v824 = vpack.c.b16 %v815, %v814
    %v825 = vpack.c.b16 %v817, %v816
    %834 = vmatprep.subr.bf16.mxu0 0
    %835 = vmatpush1.bf16.msra.mxu0 %v825
    %836 = vmatprep.subr.bf16.mxu0 0
    %837 = vmatpush1.bf16.msra.mxu0 %v824
    %838 = vmatprep.subr.bf16.mxu0 0
    %839 = vmatpush1.bf16.msra.mxu0 %v823
    %840 = vmatprep.subr.bf16.mxu0 0
    %841 = vmatpush1.bf16.msra.mxu0 %v822
    %842 = vmatprep.subr.bf16.mxu0 0
    %843 = vmatpush1.bf16.msra.mxu0 %v821
    %844 = vmatprep.subr.bf16.mxu0 0
    %845 = vmatpush1.bf16.msra.mxu0 %v820
    %846 = vmatprep.subr.bf16.mxu0 0
    %847 = vmatpush1.bf16.msra.mxu0 %v819
    %848 = vmatprep.subr.bf16.mxu0 0
    %849 = vmatpush1.bf16.msra.mxu0 %v818
    %850 = vmatprep.subr.bf16.mxu0 0
    %851 = vmatpush2.bf16.msra.mxu0 0
    %852 = vmatprep.subr.bf16.mxu0 0
    %853 = vmatpush2.bf16.msra.mxu0 0
    %854 = vmatprep.subr.bf16.mxu0 0
    %855 = vmatpush2.bf16.msra.mxu0 0
    %856 = vmatprep.subr.bf16.mxu0 0
    %857 = vmatpush2.bf16.msra.mxu0 0
    %858 = vmatprep.subr.bf16.mxu0 0
    %859 = vmatpush2.bf16.msra.mxu0 0
    %860 = vmatprep.subr.bf16.mxu0 0
    %861 = vmatpush2.bf16.msra.mxu0 0
    %862 = vmatprep.subr.bf16.mxu0 0
    %863 = vmatpush2.bf16.msra.mxu0 0
    %864 = vmatprep.subr.bf16.mxu0 0
    %865 = vmatpush2.bf16.msra.mxu0 0
    %866 = vmatprep.mubr.bf16.mxu0 0
    %867 = vmatmul.mubr.bf16.gmra.mxu0 %v733
    %v868 = vpop.f32.mrf.mxu0
    %v869 = vadd.f32 %v785, %v868
    %v870 = vpop.f32.mrf.mxu0
    %v871 = vpop.f32.mrf.mxu0
    %v872 = vadd.f32 %v785, %v871
    %v873 = vpop.f32.mrf.mxu0
    %874 = vmatprep.mubr.bf16.mxu0 0
    %875 = vmatmul.mubr.bf16.gmra.mxu0 %v734
    %v876 = vpop.f32.mrf.mxu0
    %v877 = vadd.f32 %v785, %v876
    %v878 = vpop.f32.mrf.mxu0
    %v879 = vpop.f32.mrf.mxu0
    %v880 = vadd.f32 %v785, %v879
    %v881 = vpop.f32.mrf.mxu0
    %882 = vmatprep.mubr.bf16.mxu0 0
    %883 = vmatmul.mubr.bf16.gmra.mxu0 %v735
    %v884 = vpop.f32.mrf.mxu0
    %v885 = vadd.f32 %v785, %v884
    %v886 = vpop.f32.mrf.mxu0
    %v887 = vpop.f32.mrf.mxu0
    %v888 = vadd.f32 %v785, %v887
    %v889 = vpop.f32.mrf.mxu0
    %890 = vmatprep.mubr.bf16.mxu0 0
    %891 = vmatmul.mubr.bf16.gmra.mxu0 %v736
    %v892 = vpop.f32.mrf.mxu0
    %v893 = vadd.f32 %v785, %v892
    %v894 = vpop.f32.mrf.mxu0
    %v895 = vpop.f32.mrf.mxu0
    %v896 = vadd.f32 %v785, %v895
    %v897 = vpop.f32.mrf.mxu0
    %898 = vmatprep.mubr.bf16.mxu0 0
    %899 = vmatmul.mubr.bf16.gmra.mxu0 %v737
    %v900 = vpop.f32.mrf.mxu0
    %v901 = vadd.f32 %v785, %v900
    %v902 = vpop.f32.mrf.mxu0
    %v903 = vpop.f32.mrf.mxu0
    %v904 = vadd.f32 %v785, %v903
    %v905 = vpop.f32.mrf.mxu0
    %906 = vmatprep.mubr.bf16.mxu0 0
    %907 = vmatmul.mubr.bf16.gmra.mxu0 %v738
    %v908 = vpop.f32.mrf.mxu0
    %v909 = vadd.f32 %v785, %v908
    %v910 = vpop.f32.mrf.mxu0
    %v911 = vpop.f32.mrf.mxu0
    %v912 = vadd.f32 %v785, %v911
    %v913 = vpop.f32.mrf.mxu0
    %914 = vmatprep.mubr.bf16.mxu0 0
    %915 = vmatmul.mubr.bf16.gmra.mxu0 %v739
    %v916 = vpop.f32.mrf.mxu0
    %v917 = vadd.f32 %v785, %v916
    %v918 = vpop.f32.mrf.mxu0
    %v919 = vpop.f32.mrf.mxu0
    %v920 = vadd.f32 %v785, %v919
    %v921 = vpop.f32.mrf.mxu0
    %922 = vmatprep.mubr.bf16.mxu0 0
    %923 = vmatmul.mubr.bf16.gmra.mxu0 %v740
    %v924 = vpop.f32.mrf.mxu0
    %v925 = vadd.f32 %v785, %v924
    %v926 = vpop.f32.mrf.mxu0
    %v927 = vpop.f32.mrf.mxu0
    %v928 = vadd.f32 %v785, %v927
    %v929 = vpop.f32.mrf.mxu0
    %930 = vmatprep.mubr.bf16.mxu0 0
    %931 = vmatmul.mubr.bf16.gmra.mxu0 %v741
    %v932 = vpop.f32.mrf.mxu0
    %v933 = vadd.f32 %v785, %v932
    %v934 = vpop.f32.mrf.mxu0
    %v935 = vpop.f32.mrf.mxu0
    %v936 = vadd.f32 %v785, %v935
    %v937 = vpop.f32.mrf.mxu0
    %938 = vmatprep.mubr.bf16.mxu0 0
    %939 = vmatmul.mubr.bf16.gmra.mxu0 %v742
    %v940 = vpop.f32.mrf.mxu0
    %v941 = vadd.f32 %v785, %v940
    %v942 = vpop.f32.mrf.mxu0
    %v943 = vpop.f32.mrf.mxu0
    %v944 = vadd.f32 %v785, %v943
    %v945 = vpop.f32.mrf.mxu0
    %946 = vmatprep.mubr.bf16.mxu0 0
    %947 = vmatmul.mubr.bf16.gmra.mxu0 %v743
    %v948 = vpop.f32.mrf.mxu0
    %v949 = vadd.f32 %v785, %v948
    %v950 = vpop.f32.mrf.mxu0
    %v951 = vpop.f32.mrf.mxu0
    %v952 = vadd.f32 %v785, %v951
    %v953 = vpop.f32.mrf.mxu0
    %954 = vmatprep.mubr.bf16.mxu0 0
    %955 = vmatmul.mubr.bf16.gmra.mxu0 %v744
    %v956 = vpop.f32.mrf.mxu0
    %v957 = vadd.f32 %v785, %v956
    %v958 = vpop.f32.mrf.mxu0
    %v959 = vpop.f32.mrf.mxu0
    %v960 = vadd.f32 %v785, %v959
    %v961 = vpop.f32.mrf.mxu0
    %962 = vmatprep.mubr.bf16.mxu0 0
    %963 = vmatmul.mubr.bf16.gmra.mxu0 %v745
    %v964 = vpop.f32.mrf.mxu0
    %v965 = vadd.f32 %v785, %v964
    %v966 = vpop.f32.mrf.mxu0
    %v967 = vpop.f32.mrf.mxu0
    %v968 = vadd.f32 %v785, %v967
    %v969 = vpop.f32.mrf.mxu0
    %970 = vmatprep.mubr.bf16.mxu0 0
    %971 = vmatmul.mubr.bf16.gmra.mxu0 %v746
    %v972 = vpop.f32.mrf.mxu0
    %v973 = vadd.f32 %v785, %v972
    %v974 = vpop.f32.mrf.mxu0
    %v975 = vpop.f32.mrf.mxu0
    %v976 = vadd.f32 %v785, %v975
    %v977 = vpop.f32.mrf.mxu0
    %978 = vmatprep.mubr.bf16.mxu0 0
    %979 = vmatmul.mubr.bf16.gmra.mxu0 %v747
    %v980 = vpop.f32.mrf.mxu0
    %v981 = vadd.f32 %v785, %v980
    %v982 = vpop.f32.mrf.mxu0
    %v983 = vpop.f32.mrf.mxu0
    %v984 = vadd.f32 %v785, %v983
    %v985 = vpop.f32.mrf.mxu0
    %986 = vmatprep.mubr.bf16.mxu0 0
    %987 = vmatmul.mubr.bf16.gmra.mxu0 %v748
    %v988 = vpop.f32.mrf.mxu0
    %v989 = vadd.f32 %v785, %v988
    %v990 = vpop.f32.mrf.mxu0
    %v991 = vpop.f32.mrf.mxu0
    %v992 = vadd.f32 %v785, %v991
    %v993 = vpop.f32.mrf.mxu0
    %994 = vmatprep.mubr.bf16.mxu0 0
    %995 = vmatmul.mubr.bf16.gmra.mxu0 %v749
    %v996 = vpop.f32.mrf.mxu0
    %v997 = vadd.f32 %v785, %v996
    %v998 = vpop.f32.mrf.mxu0
    %v999 = vpop.f32.mrf.mxu0
    %v1000 = vadd.f32 %v785, %v999
    %v1001 = vpop.f32.mrf.mxu0
    %1002 = vmatprep.mubr.bf16.mxu0 0
    %1003 = vmatmul.mubr.bf16.gmra.mxu0 %v750
    %v1004 = vpop.f32.mrf.mxu0
    %v1005 = vadd.f32 %v785, %v1004
    %v1006 = vpop.f32.mrf.mxu0
    %v1007 = vpop.f32.mrf.mxu0
    %v1008 = vadd.f32 %v785, %v1007
    %v1009 = vpop.f32.mrf.mxu0
    %1010 = vmatprep.mubr.bf16.mxu0 0
    %1011 = vmatmul.mubr.bf16.gmra.mxu0 %v751
    %v1012 = vpop.f32.mrf.mxu0
    %v1013 = vadd.f32 %v785, %v1012
    %v1014 = vpop.f32.mrf.mxu0
    %v1015 = vpop.f32.mrf.mxu0
    %v1016 = vadd.f32 %v785, %v1015
    %v1017 = vpop.f32.mrf.mxu0
    %1018 = vmatprep.mubr.bf16.mxu0 0
    %1019 = vmatmul.mubr.bf16.gmra.mxu0 %v752
    %v1020 = vpop.f32.mrf.mxu0
    %v1021 = vadd.f32 %v785, %v1020
    %v1022 = vpop.f32.mrf.mxu0
    %v1023 = vpop.f32.mrf.mxu0
    %v1024 = vadd.f32 %v785, %v1023
    %v1025 = vpop.f32.mrf.mxu0
    %1026 = vmatprep.mubr.bf16.mxu0 0
    %1027 = vmatmul.mubr.bf16.gmra.mxu0 %v753
    %v1028 = vpop.f32.mrf.mxu0
    %v1029 = vadd.f32 %v785, %v1028
    %v1030 = vpop.f32.mrf.mxu0
    %v1031 = vpop.f32.mrf.mxu0
    %v1032 = vadd.f32 %v785, %v1031
    %v1033 = vpop.f32.mrf.mxu0
    %1034 = vmatprep.mubr.bf16.mxu0 0
    %1035 = vmatmul.mubr.bf16.gmra.mxu0 %v754
    %v1036 = vpop.f32.mrf.mxu0
    %v1037 = vadd.f32 %v785, %v1036
    %v1038 = vpop.f32.mrf.mxu0
    %v1039 = vpop.f32.mrf.mxu0
    %v1040 = vadd.f32 %v785, %v1039
    %v1041 = vpop.f32.mrf.mxu0
    %1042 = vmatprep.mubr.bf16.mxu0 0
    %1043 = vmatmul.mubr.bf16.gmra.mxu0 %v755
    %v1044 = vpop.f32.mrf.mxu0
    %v1045 = vadd.f32 %v785, %v1044
    %v1046 = vpop.f32.mrf.mxu0
    %v1047 = vpop.f32.mrf.mxu0
    %v1048 = vadd.f32 %v785, %v1047
    %v1049 = vpop.f32.mrf.mxu0
    %1050 = vmatprep.mubr.bf16.mxu0 0
    %1051 = vmatmul.mubr.bf16.gmra.mxu0 %v756
    %v1052 = vpop.f32.mrf.mxu0
    %v1053 = vadd.f32 %v785, %v1052
    %v1054 = vpop.f32.mrf.mxu0
    %v1055 = vpop.f32.mrf.mxu0
    %v1056 = vadd.f32 %v785, %v1055
    %v1057 = vpop.f32.mrf.mxu0
    %1058 = vmatprep.mubr.bf16.mxu0 0
    %1059 = vmatmul.mubr.bf16.gmra.mxu0 %v757
    %v1060 = vpop.f32.mrf.mxu0
    %v1061 = vadd.f32 %v785, %v1060
    %v1062 = vpop.f32.mrf.mxu0
    %v1063 = vpop.f32.mrf.mxu0
    %v1064 = vadd.f32 %v785, %v1063
    %v1065 = vpop.f32.mrf.mxu0
    %1066 = vmatprep.mubr.bf16.mxu0 0
    %1067 = vmatmul.mubr.bf16.gmra.mxu0 %v758
    %v1068 = vpop.f32.mrf.mxu0
    %v1069 = vadd.f32 %v785, %v1068
    %v1070 = vpop.f32.mrf.mxu0
    %v1071 = vpop.f32.mrf.mxu0
    %v1072 = vadd.f32 %v785, %v1071
    %v1073 = vpop.f32.mrf.mxu0
    %1074 = vmatprep.mubr.bf16.mxu0 0
    %1075 = vmatmul.mubr.bf16.gmra.mxu0 %v759
    %v1076 = vpop.f32.mrf.mxu0
    %v1077 = vadd.f32 %v785, %v1076
    %v1078 = vpop.f32.mrf.mxu0
    %v1079 = vpop.f32.mrf.mxu0
    %v1080 = vadd.f32 %v785, %v1079
    %v1081 = vpop.f32.mrf.mxu0
    %1082 = vmatprep.mubr.bf16.mxu0 0
    %1083 = vmatmul.mubr.bf16.gmra.mxu0 %v760
    %v1084 = vpop.f32.mrf.mxu0
    %v1085 = vadd.f32 %v785, %v1084
    %v1086 = vpop.f32.mrf.mxu0
    %v1087 = vpop.f32.mrf.mxu0
    %v1088 = vadd.f32 %v785, %v1087
    %v1089 = vpop.f32.mrf.mxu0
    %1090 = vmatprep.mubr.bf16.mxu0 0
    %1091 = vmatmul.mubr.bf16.gmra.mxu0 %v761
    %v1092 = vpop.f32.mrf.mxu0
    %v1093 = vadd.f32 %v785, %v1092
    %v1094 = vpop.f32.mrf.mxu0
    %v1095 = vpop.f32.mrf.mxu0
    %v1096 = vadd.f32 %v785, %v1095
    %v1097 = vpop.f32.mrf.mxu0
    %1098 = vmatprep.mubr.bf16.mxu0 0
    %1099 = vmatmul.mubr.bf16.gmra.mxu0 %v762
    %v1100 = vpop.f32.mrf.mxu0
    %v1101 = vadd.f32 %v785, %v1100
    %v1102 = vpop.f32.mrf.mxu0
    %v1103 = vpop.f32.mrf.mxu0
    %v1104 = vadd.f32 %v785, %v1103
    %v1105 = vpop.f32.mrf.mxu0
    %1106 = vmatprep.mubr.bf16.mxu0 0
    %1107 = vmatmul.mubr.bf16.gmra.mxu0 %v763
    %v1108 = vpop.f32.mrf.mxu0
    %v1109 = vadd.f32 %v785, %v1108
    %v1110 = vpop.f32.mrf.mxu0
    %v1111 = vpop.f32.mrf.mxu0
    %v1112 = vadd.f32 %v785, %v1111
    %v1113 = vpop.f32.mrf.mxu0
    %1114 = vmatprep.mubr.bf16.mxu0 0
    %1115 = vmatmul.mubr.bf16.gmra.mxu0 %v764
    %v1116 = vpop.f32.mrf.mxu0
    %v1117 = vadd.f32 %v785, %v1116
    %v1118 = vpop.f32.mrf.mxu0
    %v1119 = vpop.f32.mrf.mxu0
    %v1120 = vadd.f32 %v785, %v1119
    %v1121 = vpop.f32.mrf.mxu0
    %1122 = vdwg.mxu0
    %v1123 = vmax.f32 %v869, 0.0
    %v1124 = vmax.f32 %v872, 0.0
    %v1125 = vmax.f32 %v877, 0.0
    %v1126 = vmax.f32 %v880, 0.0
    %v1127 = vmax.f32 %v885, 0.0
    %v1128 = vmax.f32 %v888, 0.0
    %v1129 = vmax.f32 %v893, 0.0
    %v1130 = vmax.f32 %v896, 0.0
    %v1131 = vmax.f32 %v901, 0.0
    %v1132 = vmax.f32 %v904, 0.0
    %v1133 = vmax.f32 %v909, 0.0
    %v1134 = vmax.f32 %v912, 0.0
    %v1135 = vmax.f32 %v917, 0.0
    %v1136 = vmax.f32 %v920, 0.0
    %v1137 = vmax.f32 %v925, 0.0
    %v1138 = vmax.f32 %v928, 0.0
    %v1139 = vmax.f32 %v933, 0.0
    %v1140 = vmax.f32 %v936, 0.0
    %v1141 = vmax.f32 %v941, 0.0
    %v1142 = vmax.f32 %v944, 0.0
    %v1143 = vmax.f32 %v949, 0.0
    %v1144 = vmax.f32 %v952, 0.0
    %v1145 = vmax.f32 %v957, 0.0
    %v1146 = vmax.f32 %v960, 0.0
    %v1147 = vmax.f32 %v965, 0.0
    %v1148 = vmax.f32 %v968, 0.0
    %v1149 = vmax.f32 %v973, 0.0
    %v1150 = vmax.f32 %v976, 0.0
    %v1151 = vmax.f32 %v981, 0.0
    %v1152 = vmax.f32 %v984, 0.0
    %v1153 = vmax.f32 %v989, 0.0
    %v1154 = vmax.f32 %v992, 0.0
    %v1155 = vmax.f32 %v997, 0.0
    %v1156 = vmax.f32 %v1000, 0.0
    %v1157 = vmax.f32 %v1005, 0.0
    %v1158 = vmax.f32 %v1008, 0.0
    %v1159 = vmax.f32 %v1013, 0.0
    %v1160 = vmax.f32 %v1016, 0.0
    %v1161 = vmax.f32 %v1021, 0.0
    %v1162 = vmax.f32 %v1024, 0.0
    %v1163 = vmax.f32 %v1029, 0.0
    %v1164 = vmax.f32 %v1032, 0.0
    %v1165 = vmax.f32 %v1037, 0.0
    %v1166 = vmax.f32 %v1040, 0.0
    %v1167 = vmax.f32 %v1045, 0.0
    %v1168 = vmax.f32 %v1048, 0.0
    %v1169 = vmax.f32 %v1053, 0.0
    %v1170 = vmax.f32 %v1056, 0.0
    %v1171 = vmax.f32 %v1061, 0.0
    %v1172 = vmax.f32 %v1064, 0.0
    %v1173 = vmax.f32 %v1069, 0.0
    %v1174 = vmax.f32 %v1072, 0.0
    %v1175 = vmax.f32 %v1077, 0.0
    %v1176 = vmax.f32 %v1080, 0.0
    %v1177 = vmax.f32 %v1085, 0.0
    %v1178 = vmax.f32 %v1088, 0.0
    %v1179 = vmax.f32 %v1093, 0.0
    %v1180 = vmax.f32 %v1096, 0.0
    %v1181 = vmax.f32 %v1101, 0.0
    %v1182 = vmax.f32 %v1104, 0.0
    %v1183 = vmax.f32 %v1109, 0.0
    %v1184 = vmax.f32 %v1112, 0.0
    %v1185 = vmax.f32 %v1117, 0.0
    %v1186 = vmax.f32 %v1120, 0.0
    %v1187 = vpack.c.bf16 %v1124, %v1123
    %v1188 = vpack.c.bf16 %v1126, %v1125
    %v1189 = vpack.c.bf16 %v1128, %v1127
    %v1190 = vpack.c.bf16 %v1130, %v1129
    %v1191 = vpack.c.bf16 %v1132, %v1131
    %v1192 = vpack.c.bf16 %v1134, %v1133
    %v1193 = vpack.c.bf16 %v1136, %v1135
    %v1194 = vpack.c.bf16 %v1138, %v1137
    %v1195 = vpack.c.bf16 %v1140, %v1139
    %v1196 = vpack.c.bf16 %v1142, %v1141
    %v1197 = vpack.c.bf16 %v1144, %v1143
    %v1198 = vpack.c.bf16 %v1146, %v1145
    %v1199 = vpack.c.bf16 %v1148, %v1147
    %v1200 = vpack.c.bf16 %v1150, %v1149
    %v1201 = vpack.c.bf16 %v1152, %v1151
    %v1202 = vpack.c.bf16 %v1154, %v1153
    %v1203 = vpack.c.bf16 %v1156, %v1155
    %v1204 = vpack.c.bf16 %v1158, %v1157
    %v1205 = vpack.c.bf16 %v1160, %v1159
    %v1206 = vpack.c.bf16 %v1162, %v1161
    %v1207 = vpack.c.bf16 %v1164, %v1163
    %v1208 = vpack.c.bf16 %v1166, %v1165
    %v1209 = vpack.c.bf16 %v1168, %v1167
    %v1210 = vpack.c.bf16 %v1170, %v1169
    %v1211 = vpack.c.bf16 %v1172, %v1171
    %v1212 = vpack.c.bf16 %v1174, %v1173
    %v1213 = vpack.c.bf16 %v1176, %v1175
    %v1214 = vpack.c.bf16 %v1178, %v1177
    %v1215 = vpack.c.bf16 %v1180, %v1179
    %v1216 = vpack.c.bf16 %v1182, %v1181
    %v1217 = vpack.c.bf16 %v1184, %v1183
    %v1218 = vpack.c.bf16 %v1186, %v1185
    %v1219 = vld [vmem:[#allocation5 + $0xc0] sm:$0xf]
    %v1220 = vld [vmem:[#allocation5 + $0xc4] sm:$0xf]
    %v1221 = vld [vmem:[#allocation5 + $0xc8] sm:$0xf]
    %v1222 = vld [vmem:[#allocation5 + $0xcc] sm:$0xf]
    %v1223 = vld [vmem:[#allocation5 + $0xd0] sm:$0xf]
    %v1224 = vld [vmem:[#allocation5 + $0xd4] sm:$0xf]
    %v1225 = vld [vmem:[#allocation5 + $0xd8] sm:$0xf]
    %v1226 = vld [vmem:[#allocation5 + $0xdc] sm:$0xf]
    %v1227 = vld [vmem:[#allocation5 + $0xe0] sm:$0xf]
    %v1228 = vld [vmem:[#allocation5 + $0xe4] sm:$0xf]
    %v1229 = vld [vmem:[#allocation5 + $0xe8] sm:$0xf]
    %v1230 = vld [vmem:[#allocation5 + $0xec] sm:$0xf]
    %v1231 = vld [vmem:[#allocation5 + $0xf0] sm:$0xf]
    %v1232 = vld [vmem:[#allocation5 + $0xf4] sm:$0xf]
    %v1233 = vld [vmem:[#allocation5 + $0xf8] sm:$0xf]
    %v1234 = vld [vmem:[#allocation5 + $0xfc] sm:$0xf]
    %v1235 = vld [vmem:[#allocation7 + $0x2] sm:$0x1]
    %v1236 = vlaneseq
    %v1237 = vshrl.u32 %v1236, 7
    %v1238 = vsub.s32 0, %v1237
    %v1239 = vrot.slane %v1235, %v1238
    %v1256 = vunpack.c.l.b16 %v1219
    %v1257 = vunpack.c.l.b16 %v1220
    %v1258 = vunpack.c.l.b16 %v1221
    %v1259 = vunpack.c.l.b16 %v1222
    %v1260 = vunpack.c.l.b16 %v1223
    %v1261 = vunpack.c.l.b16 %v1224
    %v1262 = vunpack.c.l.b16 %v1225
    %v1263 = vunpack.c.l.b16 %v1226
    %v1264 = vunpack.c.l.b16 %v1227
    %v1265 = vunpack.c.l.b16 %v1228
    %v1266 = vunpack.c.l.b16 %v1229
    %v1267 = vunpack.c.l.b16 %v1230
    %v1268 = vunpack.c.l.b16 %v1231
    %v1269 = vunpack.c.l.b16 %v1232
    %v1270 = vunpack.c.l.b16 %v1233
    %v1271 = vunpack.c.l.b16 %v1234
    %v1272 = vpack.c.b16 %v1257, %v1256
    %v1273 = vpack.c.b16 %v1259, %v1258
    %v1274 = vpack.c.b16 %v1261, %v1260
    %v1275 = vpack.c.b16 %v1263, %v1262
    %v1276 = vpack.c.b16 %v1265, %v1264
    %v1277 = vpack.c.b16 %v1267, %v1266
    %v1278 = vpack.c.b16 %v1269, %v1268
    %v1279 = vpack.c.b16 %v1271, %v1270
    %1288 = vmatprep.subr.bf16.mxu0 0
    %1289 = vmatpush1.bf16.msra.mxu0 %v1279
    %1290 = vmatprep.subr.bf16.mxu0 0
    %1291 = vmatpush1.bf16.msra.mxu0 %v1278
    %1292 = vmatprep.subr.bf16.mxu0 0
    %1293 = vmatpush1.bf16.msra.mxu0 %v1277
    %1294 = vmatprep.subr.bf16.mxu0 0
    %1295 = vmatpush1.bf16.msra.mxu0 %v1276
    %1296 = vmatprep.subr.bf16.mxu0 0
    %1297 = vmatpush1.bf16.msra.mxu0 %v1275
    %1298 = vmatprep.subr.bf16.mxu0 0
    %1299 = vmatpush1.bf16.msra.mxu0 %v1274
    %1300 = vmatprep.subr.bf16.mxu0 0
    %1301 = vmatpush1.bf16.msra.mxu0 %v1273
    %1302 = vmatprep.subr.bf16.mxu0 0
    %1303 = vmatpush1.bf16.msra.mxu0 %v1272
    %1304 = vmatprep.subr.bf16.mxu0 0
    %1305 = vmatpush2.bf16.msra.mxu0 0
    %1306 = vmatprep.subr.bf16.mxu0 0
    %1307 = vmatpush2.bf16.msra.mxu0 0
    %1308 = vmatprep.subr.bf16.mxu0 0
    %1309 = vmatpush2.bf16.msra.mxu0 0
    %1310 = vmatprep.subr.bf16.mxu0 0
    %1311 = vmatpush2.bf16.msra.mxu0 0
    %1312 = vmatprep.subr.bf16.mxu0 0
    %1313 = vmatpush2.bf16.msra.mxu0 0
    %1314 = vmatprep.subr.bf16.mxu0 0
    %1315 = vmatpush2.bf16.msra.mxu0 0
    %1316 = vmatprep.subr.bf16.mxu0 0
    %1317 = vmatpush2.bf16.msra.mxu0 0
    %1318 = vmatprep.subr.bf16.mxu0 0
    %1319 = vmatpush2.bf16.msra.mxu0 0
    %1320 = vmatprep.mubr.bf16.mxu0 0
    %1321 = vmatmul.mubr.bf16.gmra.mxu0 %v1187
    %v1322 = vpop.f32.mrf.mxu0
    %v1323 = vadd.f32 %v1239, %v1322
    %v1324 = vpop.f32.mrf.mxu0
    %v1325 = vpop.f32.mrf.mxu0
    %v1326 = vadd.f32 %v1239, %v1325
    %v1327 = vpop.f32.mrf.mxu0
    %1328 = vmatprep.mubr.bf16.mxu0 0
    %1329 = vmatmul.mubr.bf16.gmra.mxu0 %v1188
    %v1330 = vpop.f32.mrf.mxu0
    %v1331 = vadd.f32 %v1239, %v1330
    %v1332 = vpop.f32.mrf.mxu0
    %v1333 = vpop.f32.mrf.mxu0
    %v1334 = vadd.f32 %v1239, %v1333
    %v1335 = vpop.f32.mrf.mxu0
    %1336 = vmatprep.mubr.bf16.mxu0 0
    %1337 = vmatmul.mubr.bf16.gmra.mxu0 %v1189
    %v1338 = vpop.f32.mrf.mxu0
    %v1339 = vadd.f32 %v1239, %v1338
    %v1340 = vpop.f32.mrf.mxu0
    %v1341 = vpop.f32.mrf.mxu0
    %v1342 = vadd.f32 %v1239, %v1341
    %v1343 = vpop.f32.mrf.mxu0
    %1344 = vmatprep.mubr.bf16.mxu0 0
    %1345 = vmatmul.mubr.bf16.gmra.mxu0 %v1190
    %v1346 = vpop.f32.mrf.mxu0
    %v1347 = vadd.f32 %v1239, %v1346
    %v1348 = vpop.f32.mrf.mxu0
    %v1349 = vpop.f32.mrf.mxu0
    %v1350 = vadd.f32 %v1239, %v1349
    %v1351 = vpop.f32.mrf.mxu0
    %1352 = vmatprep.mubr.bf16.mxu0 0
    %1353 = vmatmul.mubr.bf16.gmra.mxu0 %v1191
    %v1354 = vpop.f32.mrf.mxu0
    %v1355 = vadd.f32 %v1239, %v1354
    %v1356 = vpop.f32.mrf.mxu0
    %v1357 = vpop.f32.mrf.mxu0
    %v1358 = vadd.f32 %v1239, %v1357
    %v1359 = vpop.f32.mrf.mxu0
    %1360 = vmatprep.mubr.bf16.mxu0 0
    %1361 = vmatmul.mubr.bf16.gmra.mxu0 %v1192
    %v1362 = vpop.f32.mrf.mxu0
    %v1363 = vadd.f32 %v1239, %v1362
    %v1364 = vpop.f32.mrf.mxu0
    %v1365 = vpop.f32.mrf.mxu0
    %v1366 = vadd.f32 %v1239, %v1365
    %v1367 = vpop.f32.mrf.mxu0
    %1368 = vmatprep.mubr.bf16.mxu0 0
    %1369 = vmatmul.mubr.bf16.gmra.mxu0 %v1193
    %v1370 = vpop.f32.mrf.mxu0
    %v1371 = vadd.f32 %v1239, %v1370
    %v1372 = vpop.f32.mrf.mxu0
    %v1373 = vpop.f32.mrf.mxu0
    %v1374 = vadd.f32 %v1239, %v1373
    %v1375 = vpop.f32.mrf.mxu0
    %1376 = vmatprep.mubr.bf16.mxu0 0
    %1377 = vmatmul.mubr.bf16.gmra.mxu0 %v1194
    %v1378 = vpop.f32.mrf.mxu0
    %v1379 = vadd.f32 %v1239, %v1378
    %v1380 = vpop.f32.mrf.mxu0
    %v1381 = vpop.f32.mrf.mxu0
    %v1382 = vadd.f32 %v1239, %v1381
    %v1383 = vpop.f32.mrf.mxu0
    %1384 = vmatprep.mubr.bf16.mxu0 0
    %1385 = vmatmul.mubr.bf16.gmra.mxu0 %v1195
    %v1386 = vpop.f32.mrf.mxu0
    %v1387 = vadd.f32 %v1239, %v1386
    %v1388 = vpop.f32.mrf.mxu0
    %v1389 = vpop.f32.mrf.mxu0
    %v1390 = vadd.f32 %v1239, %v1389
    %v1391 = vpop.f32.mrf.mxu0
    %1392 = vmatprep.mubr.bf16.mxu0 0
    %1393 = vmatmul.mubr.bf16.gmra.mxu0 %v1196
    %v1394 = vpop.f32.mrf.mxu0
    %v1395 = vadd.f32 %v1239, %v1394
    %v1396 = vpop.f32.mrf.mxu0
    %v1397 = vpop.f32.mrf.mxu0
    %v1398 = vadd.f32 %v1239, %v1397
    %v1399 = vpop.f32.mrf.mxu0
    %1400 = vmatprep.mubr.bf16.mxu0 0
    %1401 = vmatmul.mubr.bf16.gmra.mxu0 %v1197
    %v1402 = vpop.f32.mrf.mxu0
    %v1403 = vadd.f32 %v1239, %v1402
    %v1404 = vpop.f32.mrf.mxu0
    %v1405 = vpop.f32.mrf.mxu0
    %v1406 = vadd.f32 %v1239, %v1405
    %v1407 = vpop.f32.mrf.mxu0
    %1408 = vmatprep.mubr.bf16.mxu0 0
    %1409 = vmatmul.mubr.bf16.gmra.mxu0 %v1198
    %v1410 = vpop.f32.mrf.mxu0
    %v1411 = vadd.f32 %v1239, %v1410
    %v1412 = vpop.f32.mrf.mxu0
    %v1413 = vpop.f32.mrf.mxu0
    %v1414 = vadd.f32 %v1239, %v1413
    %v1415 = vpop.f32.mrf.mxu0
    %1416 = vmatprep.mubr.bf16.mxu0 0
    %1417 = vmatmul.mubr.bf16.gmra.mxu0 %v1199
    %v1418 = vpop.f32.mrf.mxu0
    %v1419 = vadd.f32 %v1239, %v1418
    %v1420 = vpop.f32.mrf.mxu0
    %v1421 = vpop.f32.mrf.mxu0
    %v1422 = vadd.f32 %v1239, %v1421
    %v1423 = vpop.f32.mrf.mxu0
    %1424 = vmatprep.mubr.bf16.mxu0 0
    %1425 = vmatmul.mubr.bf16.gmra.mxu0 %v1200
    %v1426 = vpop.f32.mrf.mxu0
    %v1427 = vadd.f32 %v1239, %v1426
    %v1428 = vpop.f32.mrf.mxu0
    %v1429 = vpop.f32.mrf.mxu0
    %v1430 = vadd.f32 %v1239, %v1429
    %v1431 = vpop.f32.mrf.mxu0
    %1432 = vmatprep.mubr.bf16.mxu0 0
    %1433 = vmatmul.mubr.bf16.gmra.mxu0 %v1201
    %v1434 = vpop.f32.mrf.mxu0
    %v1435 = vadd.f32 %v1239, %v1434
    %v1436 = vpop.f32.mrf.mxu0
    %v1437 = vpop.f32.mrf.mxu0
    %v1438 = vadd.f32 %v1239, %v1437
    %v1439 = vpop.f32.mrf.mxu0
    %1440 = vmatprep.mubr.bf16.mxu0 0
    %1441 = vmatmul.mubr.bf16.gmra.mxu0 %v1202
    %v1442 = vpop.f32.mrf.mxu0
    %v1443 = vadd.f32 %v1239, %v1442
    %v1444 = vpop.f32.mrf.mxu0
    %v1445 = vpop.f32.mrf.mxu0
    %v1446 = vadd.f32 %v1239, %v1445
    %v1447 = vpop.f32.mrf.mxu0
    %1448 = vmatprep.mubr.bf16.mxu0 0
    %1449 = vmatmul.mubr.bf16.gmra.mxu0 %v1203
    %v1450 = vpop.f32.mrf.mxu0
    %v1451 = vadd.f32 %v1239, %v1450
    %v1452 = vpop.f32.mrf.mxu0
    %v1453 = vpop.f32.mrf.mxu0
    %v1454 = vadd.f32 %v1239, %v1453
    %v1455 = vpop.f32.mrf.mxu0
    %1456 = vmatprep.mubr.bf16.mxu0 0
    %1457 = vmatmul.mubr.bf16.gmra.mxu0 %v1204
    %v1458 = vpop.f32.mrf.mxu0
    %v1459 = vadd.f32 %v1239, %v1458
    %v1460 = vpop.f32.mrf.mxu0
    %v1461 = vpop.f32.mrf.mxu0
    %v1462 = vadd.f32 %v1239, %v1461
    %v1463 = vpop.f32.mrf.mxu0
    %1464 = vmatprep.mubr.bf16.mxu0 0
    %1465 = vmatmul.mubr.bf16.gmra.mxu0 %v1205
    %v1466 = vpop.f32.mrf.mxu0
    %v1467 = vadd.f32 %v1239, %v1466
    %v1468 = vpop.f32.mrf.mxu0
    %v1469 = vpop.f32.mrf.mxu0
    %v1470 = vadd.f32 %v1239, %v1469
    %v1471 = vpop.f32.mrf.mxu0
    %1472 = vmatprep.mubr.bf16.mxu0 0
    %1473 = vmatmul.mubr.bf16.gmra.mxu0 %v1206
    %v1474 = vpop.f32.mrf.mxu0
    %v1475 = vadd.f32 %v1239, %v1474
    %v1476 = vpop.f32.mrf.mxu0
    %v1477 = vpop.f32.mrf.mxu0
    %v1478 = vadd.f32 %v1239, %v1477
    %v1479 = vpop.f32.mrf.mxu0
    %1480 = vmatprep.mubr.bf16.mxu0 0
    %1481 = vmatmul.mubr.bf16.gmra.mxu0 %v1207
    %v1482 = vpop.f32.mrf.mxu0
    %v1483 = vadd.f32 %v1239, %v1482
    %v1484 = vpop.f32.mrf.mxu0
    %v1485 = vpop.f32.mrf.mxu0
    %v1486 = vadd.f32 %v1239, %v1485
    %v1487 = vpop.f32.mrf.mxu0
    %1488 = vmatprep.mubr.bf16.mxu0 0
    %1489 = vmatmul.mubr.bf16.gmra.mxu0 %v1208
    %v1490 = vpop.f32.mrf.mxu0
    %v1491 = vadd.f32 %v1239, %v1490
    %v1492 = vpop.f32.mrf.mxu0
    %v1493 = vpop.f32.mrf.mxu0
    %v1494 = vadd.f32 %v1239, %v1493
    %v1495 = vpop.f32.mrf.mxu0
    %1496 = vmatprep.mubr.bf16.mxu0 0
    %1497 = vmatmul.mubr.bf16.gmra.mxu0 %v1209
    %v1498 = vpop.f32.mrf.mxu0
    %v1499 = vadd.f32 %v1239, %v1498
    %v1500 = vpop.f32.mrf.mxu0
    %v1501 = vpop.f32.mrf.mxu0
    %v1502 = vadd.f32 %v1239, %v1501
    %v1503 = vpop.f32.mrf.mxu0
    %1504 = vmatprep.mubr.bf16.mxu0 0
    %1505 = vmatmul.mubr.bf16.gmra.mxu0 %v1210
    %v1506 = vpop.f32.mrf.mxu0
    %v1507 = vadd.f32 %v1239, %v1506
    %v1508 = vpop.f32.mrf.mxu0
    %v1509 = vpop.f32.mrf.mxu0
    %v1510 = vadd.f32 %v1239, %v1509
    %v1511 = vpop.f32.mrf.mxu0
    %1512 = vmatprep.mubr.bf16.mxu0 0
    %1513 = vmatmul.mubr.bf16.gmra.mxu0 %v1211
    %v1514 = vpop.f32.mrf.mxu0
    %v1515 = vadd.f32 %v1239, %v1514
    %v1516 = vpop.f32.mrf.mxu0
    %v1517 = vpop.f32.mrf.mxu0
    %v1518 = vadd.f32 %v1239, %v1517
    %v1519 = vpop.f32.mrf.mxu0
    %1520 = vmatprep.mubr.bf16.mxu0 0
    %1521 = vmatmul.mubr.bf16.gmra.mxu0 %v1212
    %v1522 = vpop.f32.mrf.mxu0
    %v1523 = vadd.f32 %v1239, %v1522
    %v1524 = vpop.f32.mrf.mxu0
    %v1525 = vpop.f32.mrf.mxu0
    %v1526 = vadd.f32 %v1239, %v1525
    %v1527 = vpop.f32.mrf.mxu0
    %1528 = vmatprep.mubr.bf16.mxu0 0
    %1529 = vmatmul.mubr.bf16.gmra.mxu0 %v1213
    %v1530 = vpop.f32.mrf.mxu0
    %v1531 = vadd.f32 %v1239, %v1530
    %v1532 = vpop.f32.mrf.mxu0
    %v1533 = vpop.f32.mrf.mxu0
    %v1534 = vadd.f32 %v1239, %v1533
    %v1535 = vpop.f32.mrf.mxu0
    %1536 = vmatprep.mubr.bf16.mxu0 0
    %1537 = vmatmul.mubr.bf16.gmra.mxu0 %v1214
    %v1538 = vpop.f32.mrf.mxu0
    %v1539 = vadd.f32 %v1239, %v1538
    %v1540 = vpop.f32.mrf.mxu0
    %v1541 = vpop.f32.mrf.mxu0
    %v1542 = vadd.f32 %v1239, %v1541
    %v1543 = vpop.f32.mrf.mxu0
    %1544 = vmatprep.mubr.bf16.mxu0 0
    %1545 = vmatmul.mubr.bf16.gmra.mxu0 %v1215
    %v1546 = vpop.f32.mrf.mxu0
    %v1547 = vadd.f32 %v1239, %v1546
    %v1548 = vpop.f32.mrf.mxu0
    %v1549 = vpop.f32.mrf.mxu0
    %v1550 = vadd.f32 %v1239, %v1549
    %v1551 = vpop.f32.mrf.mxu0
    %1552 = vmatprep.mubr.bf16.mxu0 0
    %1553 = vmatmul.mubr.bf16.gmra.mxu0 %v1216
    %v1554 = vpop.f32.mrf.mxu0
    %v1555 = vadd.f32 %v1239, %v1554
    %v1556 = vpop.f32.mrf.mxu0
    %v1557 = vpop.f32.mrf.mxu0
    %v1558 = vadd.f32 %v1239, %v1557
    %v1559 = vpop.f32.mrf.mxu0
    %1560 = vmatprep.mubr.bf16.mxu0 0
    %1561 = vmatmul.mubr.bf16.gmra.mxu0 %v1217
    %v1562 = vpop.f32.mrf.mxu0
    %v1563 = vadd.f32 %v1239, %v1562
    %v1564 = vpop.f32.mrf.mxu0
    %v1565 = vpop.f32.mrf.mxu0
    %v1566 = vadd.f32 %v1239, %v1565
    %v1567 = vpop.f32.mrf.mxu0
    %1568 = vmatprep.mubr.bf16.mxu0 0
    %1569 = vmatmul.mubr.bf16.gmra.mxu0 %v1218
    %v1570 = vpop.f32.mrf.mxu0
    %v1571 = vadd.f32 %v1239, %v1570
    %v1572 = vpop.f32.mrf.mxu0
    %v1573 = vpop.f32.mrf.mxu0
    %v1574 = vadd.f32 %v1239, %v1573
    %v1575 = vpop.f32.mrf.mxu0
    %1576 = vdwg.mxu0
    %v1577 = vmax.f32 %v1323, 0.0
    %v1578 = vmax.f32 %v1326, 0.0
    %v1579 = vmax.f32 %v1331, 0.0
    %v1580 = vmax.f32 %v1334, 0.0
    %v1581 = vmax.f32 %v1339, 0.0
    %v1582 = vmax.f32 %v1342, 0.0
    %v1583 = vmax.f32 %v1347, 0.0
    %v1584 = vmax.f32 %v1350, 0.0
    %v1585 = vmax.f32 %v1355, 0.0
    %v1586 = vmax.f32 %v1358, 0.0
    %v1587 = vmax.f32 %v1363, 0.0
    %v1588 = vmax.f32 %v1366, 0.0
    %v1589 = vmax.f32 %v1371, 0.0
    %v1590 = vmax.f32 %v1374, 0.0
    %v1591 = vmax.f32 %v1379, 0.0
    %v1592 = vmax.f32 %v1382, 0.0
    %v1593 = vmax.f32 %v1387, 0.0
    %v1594 = vmax.f32 %v1390, 0.0
    %v1595 = vmax.f32 %v1395, 0.0
    %v1596 = vmax.f32 %v1398, 0.0
    %v1597 = vmax.f32 %v1403, 0.0
    %v1598 = vmax.f32 %v1406, 0.0
    %v1599 = vmax.f32 %v1411, 0.0
    %v1600 = vmax.f32 %v1414, 0.0
    %v1601 = vmax.f32 %v1419, 0.0
    %v1602 = vmax.f32 %v1422, 0.0
    %v1603 = vmax.f32 %v1427, 0.0
    %v1604 = vmax.f32 %v1430, 0.0
    %v1605 = vmax.f32 %v1435, 0.0
    %v1606 = vmax.f32 %v1438, 0.0
    %v1607 = vmax.f32 %v1443, 0.0
    %v1608 = vmax.f32 %v1446, 0.0
    %v1609 = vmax.f32 %v1451, 0.0
    %v1610 = vmax.f32 %v1454, 0.0
    %v1611 = vmax.f32 %v1459, 0.0
    %v1612 = vmax.f32 %v1462, 0.0
    %v1613 = vmax.f32 %v1467, 0.0
    %v1614 = vmax.f32 %v1470, 0.0
    %v1615 = vmax.f32 %v1475, 0.0
    %v1616 = vmax.f32 %v1478, 0.0
    %v1617 = vmax.f32 %v1483, 0.0
    %v1618 = vmax.f32 %v1486, 0.0
    %v1619 = vmax.f32 %v1491, 0.0
    %v1620 = vmax.f32 %v1494, 0.0
    %v1621 = vmax.f32 %v1499, 0.0
    %v1622 = vmax.f32 %v1502, 0.0
    %v1623 = vmax.f32 %v1507, 0.0
    %v1624 = vmax.f32 %v1510, 0.0
    %v1625 = vmax.f32 %v1515, 0.0
    %v1626 = vmax.f32 %v1518, 0.0
    %v1627 = vmax.f32 %v1523, 0.0
    %v1628 = vmax.f32 %v1526, 0.0
    %v1629 = vmax.f32 %v1531, 0.0
    %v1630 = vmax.f32 %v1534, 0.0
    %v1631 = vmax.f32 %v1539, 0.0
    %v1632 = vmax.f32 %v1542, 0.0
    %v1633 = vmax.f32 %v1547, 0.0
    %v1634 = vmax.f32 %v1550, 0.0
    %v1635 = vmax.f32 %v1555, 0.0
    %v1636 = vmax.f32 %v1558, 0.0
    %v1637 = vmax.f32 %v1563, 0.0
    %v1638 = vmax.f32 %v1566, 0.0
    %v1639 = vmax.f32 %v1571, 0.0
    %v1640 = vmax.f32 %v1574, 0.0
    %v1641 = vpack.c.bf16 %v1578, %v1577
    %v1642 = vpack.c.bf16 %v1580, %v1579
    %v1643 = vpack.c.bf16 %v1582, %v1581
    %v1644 = vpack.c.bf16 %v1584, %v1583
    %v1645 = vpack.c.bf16 %v1586, %v1585
    %v1646 = vpack.c.bf16 %v1588, %v1587
    %v1647 = vpack.c.bf16 %v1590, %v1589
    %v1648 = vpack.c.bf16 %v1592, %v1591
    %v1649 = vpack.c.bf16 %v1594, %v1593
    %v1650 = vpack.c.bf16 %v1596, %v1595
    %v1651 = vpack.c.bf16 %v1598, %v1597
    %v1652 = vpack.c.bf16 %v1600, %v1599
    %v1653 = vpack.c.bf16 %v1602, %v1601
    %v1654 = vpack.c.bf16 %v1604, %v1603
    %v1655 = vpack.c.bf16 %v1606, %v1605
    %v1656 = vpack.c.bf16 %v1608, %v1607
    %v1657 = vpack.c.bf16 %v1610, %v1609
    %v1658 = vpack.c.bf16 %v1612, %v1611
    %v1659 = vpack.c.bf16 %v1614, %v1613
    %v1660 = vpack.c.bf16 %v1616, %v1615
    %v1661 = vpack.c.bf16 %v1618, %v1617
    %v1662 = vpack.c.bf16 %v1620, %v1619
    %v1663 = vpack.c.bf16 %v1622, %v1621
    %v1664 = vpack.c.bf16 %v1624, %v1623
    %v1665 = vpack.c.bf16 %v1626, %v1625
    %v1666 = vpack.c.bf16 %v1628, %v1627
    %v1667 = vpack.c.bf16 %v1630, %v1629
    %v1668 = vpack.c.bf16 %v1632, %v1631
    %v1669 = vpack.c.bf16 %v1634, %v1633
    %v1670 = vpack.c.bf16 %v1636, %v1635
    %v1671 = vpack.c.bf16 %v1638, %v1637
    %v1672 = vpack.c.bf16 %v1640, %v1639
    %v1673 = vld [vmem:[#allocation5 + $0x100] sm:$0xf]
    %v1674 = vld [vmem:[#allocation5 + $0x104] sm:$0xf]
    %v1675 = vld [vmem:[#allocation5 + $0x108] sm:$0xf]
    %v1676 = vld [vmem:[#allocation5 + $0x10c] sm:$0xf]
    %v1677 = vld [vmem:[#allocation5 + $0x110] sm:$0xf]
    %v1678 = vld [vmem:[#allocation5 + $0x114] sm:$0xf]
    %v1679 = vld [vmem:[#allocation5 + $0x118] sm:$0xf]
    %v1680 = vld [vmem:[#allocation5 + $0x11c] sm:$0xf]
    %v1681 = vld [vmem:[#allocation5 + $0x120] sm:$0xf]
    %v1682 = vld [vmem:[#allocation5 + $0x124] sm:$0xf]
    %v1683 = vld [vmem:[#allocation5 + $0x128] sm:$0xf]
    %v1684 = vld [vmem:[#allocation5 + $0x12c] sm:$0xf]
    %v1685 = vld [vmem:[#allocation5 + $0x130] sm:$0xf]
    %v1686 = vld [vmem:[#allocation5 + $0x134] sm:$0xf]
    %v1687 = vld [vmem:[#allocation5 + $0x138] sm:$0xf]
    %v1688 = vld [vmem:[#allocation5 + $0x13c] sm:$0xf]
    %v1689 = vld [vmem:[#allocation7 + $0x3] sm:$0x1]
    %v1690 = vlaneseq
    %v1691 = vshrl.u32 %v1690, 7
    %v1692 = vsub.s32 0, %v1691
    %v1693 = vrot.slane %v1689, %v1692
    %v1710 = vunpack.c.l.b16 %v1673
    %v1711 = vunpack.c.l.b16 %v1674
    %v1712 = vunpack.c.l.b16 %v1675
    %v1713 = vunpack.c.l.b16 %v1676
    %v1714 = vunpack.c.l.b16 %v1677
    %v1715 = vunpack.c.l.b16 %v1678
    %v1716 = vunpack.c.l.b16 %v1679
    %v1717 = vunpack.c.l.b16 %v1680
    %v1718 = vunpack.c.l.b16 %v1681
    %v1719 = vunpack.c.l.b16 %v1682
    %v1720 = vunpack.c.l.b16 %v1683
    %v1721 = vunpack.c.l.b16 %v1684
    %v1722 = vunpack.c.l.b16 %v1685
    %v1723 = vunpack.c.l.b16 %v1686
    %v1724 = vunpack.c.l.b16 %v1687
    %v1725 = vunpack.c.l.b16 %v1688
    %v1726 = vpack.c.b16 %v1711, %v1710
    %v1727 = vpack.c.b16 %v1713, %v1712
    %v1728 = vpack.c.b16 %v1715, %v1714
    %v1729 = vpack.c.b16 %v1717, %v1716
    %v1730 = vpack.c.b16 %v1719, %v1718
    %v1731 = vpack.c.b16 %v1721, %v1720
    %v1732 = vpack.c.b16 %v1723, %v1722
    %v1733 = vpack.c.b16 %v1725, %v1724
    %1742 = vmatprep.subr.bf16.mxu0 0
    %1743 = vmatpush1.bf16.msra.mxu0 %v1733
    %1744 = vmatprep.subr.bf16.mxu0 0
    %1745 = vmatpush1.bf16.msra.mxu0 %v1732
    %1746 = vmatprep.subr.bf16.mxu0 0
    %1747 = vmatpush1.bf16.msra.mxu0 %v1731
    %1748 = vmatprep.subr.bf16.mxu0 0
    %1749 = vmatpush1.bf16.msra.mxu0 %v1730
    %1750 = vmatprep.subr.bf16.mxu0 0
    %1751 = vmatpush1.bf16.msra.mxu0 %v1729
    %1752 = vmatprep.subr.bf16.mxu0 0
    %1753 = vmatpush1.bf16.msra.mxu0 %v1728
    %1754 = vmatprep.subr.bf16.mxu0 0
    %1755 = vmatpush1.bf16.msra.mxu0 %v1727
    %1756 = vmatprep.subr.bf16.mxu0 0
    %1757 = vmatpush1.bf16.msra.mxu0 %v1726
    %1758 = vmatprep.subr.bf16.mxu0 0
    %1759 = vmatpush2.bf16.msra.mxu0 0
    %1760 = vmatprep.subr.bf16.mxu0 0
    %1761 = vmatpush2.bf16.msra.mxu0 0
    %1762 = vmatprep.subr.bf16.mxu0 0
    %1763 = vmatpush2.bf16.msra.mxu0 0
    %1764 = vmatprep.subr.bf16.mxu0 0
    %1765 = vmatpush2.bf16.msra.mxu0 0
    %1766 = vmatprep.subr.bf16.mxu0 0
    %1767 = vmatpush2.bf16.msra.mxu0 0
    %1768 = vmatprep.subr.bf16.mxu0 0
    %1769 = vmatpush2.bf16.msra.mxu0 0
    %1770 = vmatprep.subr.bf16.mxu0 0
    %1771 = vmatpush2.bf16.msra.mxu0 0
    %1772 = vmatprep.subr.bf16.mxu0 0
    %1773 = vmatpush2.bf16.msra.mxu0 0
    %1774 = vmatprep.mubr.bf16.mxu0 0
    %1775 = vmatmul.mubr.bf16.gmra.mxu0 %v1641
    %v1776 = vpop.f32.mrf.mxu0
    %v1777 = vadd.f32 %v1693, %v1776
    %v1778 = vpop.f32.mrf.mxu0
    %v1779 = vpop.f32.mrf.mxu0
    %v1780 = vadd.f32 %v1693, %v1779
    %v1781 = vpop.f32.mrf.mxu0
    %1782 = vmatprep.mubr.bf16.mxu0 0
    %1783 = vmatmul.mubr.bf16.gmra.mxu0 %v1642
    %v1784 = vpop.f32.mrf.mxu0
    %v1785 = vadd.f32 %v1693, %v1784
    %v1786 = vpop.f32.mrf.mxu0
    %v1787 = vpop.f32.mrf.mxu0
    %v1788 = vadd.f32 %v1693, %v1787
    %v1789 = vpop.f32.mrf.mxu0
    %1790 = vmatprep.mubr.bf16.mxu0 0
    %1791 = vmatmul.mubr.bf16.gmra.mxu0 %v1643
    %v1792 = vpop.f32.mrf.mxu0
    %v1793 = vadd.f32 %v1693, %v1792
    %v1794 = vpop.f32.mrf.mxu0
    %v1795 = vpop.f32.mrf.mxu0
    %v1796 = vadd.f32 %v1693, %v1795
    %v1797 = vpop.f32.mrf.mxu0
    %1798 = vmatprep.mubr.bf16.mxu0 0
    %1799 = vmatmul.mubr.bf16.gmra.mxu0 %v1644
    %v1800 = vpop.f32.mrf.mxu0
    %v1801 = vadd.f32 %v1693, %v1800
    %v1802 = vpop.f32.mrf.mxu0
    %v1803 = vpop.f32.mrf.mxu0
    %v1804 = vadd.f32 %v1693, %v1803
    %v1805 = vpop.f32.mrf.mxu0
    %1806 = vmatprep.mubr.bf16.mxu0 0
    %1807 = vmatmul.mubr.bf16.gmra.mxu0 %v1645
    %v1808 = vpop.f32.mrf.mxu0
    %v1809 = vadd.f32 %v1693, %v1808
    %v1810 = vpop.f32.mrf.mxu0
    %v1811 = vpop.f32.mrf.mxu0
    %v1812 = vadd.f32 %v1693, %v1811
    %v1813 = vpop.f32.mrf.mxu0
    %1814 = vmatprep.mubr.bf16.mxu0 0
    %1815 = vmatmul.mubr.bf16.gmra.mxu0 %v1646
    %v1816 = vpop.f32.mrf.mxu0
    %v1817 = vadd.f32 %v1693, %v1816
    %v1818 = vpop.f32.mrf.mxu0
    %v1819 = vpop.f32.mrf.mxu0
    %v1820 = vadd.f32 %v1693, %v1819
    %v1821 = vpop.f32.mrf.mxu0
    %1822 = vmatprep.mubr.bf16.mxu0 0
    %1823 = vmatmul.mubr.bf16.gmra.mxu0 %v1647
    %v1824 = vpop.f32.mrf.mxu0
    %v1825 = vadd.f32 %v1693, %v1824
    %v1826 = vpop.f32.mrf.mxu0
    %v1827 = vpop.f32.mrf.mxu0
    %v1828 = vadd.f32 %v1693, %v1827
    %v1829 = vpop.f32.mrf.mxu0
    %1830 = vmatprep.mubr.bf16.mxu0 0
    %1831 = vmatmul.mubr.bf16.gmra.mxu0 %v1648
    %v1832 = vpop.f32.mrf.mxu0
    %v1833 = vadd.f32 %v1693, %v1832
    %v1834 = vpop.f32.mrf.mxu0
    %v1835 = vpop.f32.mrf.mxu0
    %v1836 = vadd.f32 %v1693, %v1835
    %v1837 = vpop.f32.mrf.mxu0
    %1838 = vmatprep.mubr.bf16.mxu0 0
    %1839 = vmatmul.mubr.bf16.gmra.mxu0 %v1649
    %v1840 = vpop.f32.mrf.mxu0
    %v1841 = vadd.f32 %v1693, %v1840
    %v1842 = vpop.f32.mrf.mxu0
    %v1843 = vpop.f32.mrf.mxu0
    %v1844 = vadd.f32 %v1693, %v1843
    %v1845 = vpop.f32.mrf.mxu0
    %1846 = vmatprep.mubr.bf16.mxu0 0
    %1847 = vmatmul.mubr.bf16.gmra.mxu0 %v1650
    %v1848 = vpop.f32.mrf.mxu0
    %v1849 = vadd.f32 %v1693, %v1848
    %v1850 = vpop.f32.mrf.mxu0
    %v1851 = vpop.f32.mrf.mxu0
    %v1852 = vadd.f32 %v1693, %v1851
    %v1853 = vpop.f32.mrf.mxu0
    %1854 = vmatprep.mubr.bf16.mxu0 0
    %1855 = vmatmul.mubr.bf16.gmra.mxu0 %v1651
    %v1856 = vpop.f32.mrf.mxu0
    %v1857 = vadd.f32 %v1693, %v1856
    %v1858 = vpop.f32.mrf.mxu0
    %v1859 = vpop.f32.mrf.mxu0
    %v1860 = vadd.f32 %v1693, %v1859
    %v1861 = vpop.f32.mrf.mxu0
    %1862 = vmatprep.mubr.bf16.mxu0 0
    %1863 = vmatmul.mubr.bf16.gmra.mxu0 %v1652
    %v1864 = vpop.f32.mrf.mxu0
    %v1865 = vadd.f32 %v1693, %v1864
    %v1866 = vpop.f32.mrf.mxu0
    %v1867 = vpop.f32.mrf.mxu0
    %v1868 = vadd.f32 %v1693, %v1867
    %v1869 = vpop.f32.mrf.mxu0
    %1870 = vmatprep.mubr.bf16.mxu0 0
    %1871 = vmatmul.mubr.bf16.gmra.mxu0 %v1653
    %v1872 = vpop.f32.mrf.mxu0
    %v1873 = vadd.f32 %v1693, %v1872
    %v1874 = vpop.f32.mrf.mxu0
    %v1875 = vpop.f32.mrf.mxu0
    %v1876 = vadd.f32 %v1693, %v1875
    %v1877 = vpop.f32.mrf.mxu0
    %1878 = vmatprep.mubr.bf16.mxu0 0
    %1879 = vmatmul.mubr.bf16.gmra.mxu0 %v1654
    %v1880 = vpop.f32.mrf.mxu0
    %v1881 = vadd.f32 %v1693, %v1880
    %v1882 = vpop.f32.mrf.mxu0
    %v1883 = vpop.f32.mrf.mxu0
    %v1884 = vadd.f32 %v1693, %v1883
    %v1885 = vpop.f32.mrf.mxu0
    %1886 = vmatprep.mubr.bf16.mxu0 0
    %1887 = vmatmul.mubr.bf16.gmra.mxu0 %v1655
    %v1888 = vpop.f32.mrf.mxu0
    %v1889 = vadd.f32 %v1693, %v1888
    %v1890 = vpop.f32.mrf.mxu0
    %v1891 = vpop.f32.mrf.mxu0
    %v1892 = vadd.f32 %v1693, %v1891
    %v1893 = vpop.f32.mrf.mxu0
    %1894 = vmatprep.mubr.bf16.mxu0 0
    %1895 = vmatmul.mubr.bf16.gmra.mxu0 %v1656
    %v1896 = vpop.f32.mrf.mxu0
    %v1897 = vadd.f32 %v1693, %v1896
    %v1898 = vpop.f32.mrf.mxu0
    %v1899 = vpop.f32.mrf.mxu0
    %v1900 = vadd.f32 %v1693, %v1899
    %v1901 = vpop.f32.mrf.mxu0
    %1902 = vmatprep.mubr.bf16.mxu0 0
    %1903 = vmatmul.mubr.bf16.gmra.mxu0 %v1657
    %v1904 = vpop.f32.mrf.mxu0
    %v1905 = vadd.f32 %v1693, %v1904
    %v1906 = vpop.f32.mrf.mxu0
    %v1907 = vpop.f32.mrf.mxu0
    %v1908 = vadd.f32 %v1693, %v1907
    %v1909 = vpop.f32.mrf.mxu0
    %1910 = vmatprep.mubr.bf16.mxu0 0
    %1911 = vmatmul.mubr.bf16.gmra.mxu0 %v1658
    %v1912 = vpop.f32.mrf.mxu0
    %v1913 = vadd.f32 %v1693, %v1912
    %v1914 = vpop.f32.mrf.mxu0
    %v1915 = vpop.f32.mrf.mxu0
    %v1916 = vadd.f32 %v1693, %v1915
    %v1917 = vpop.f32.mrf.mxu0
    %1918 = vmatprep.mubr.bf16.mxu0 0
    %1919 = vmatmul.mubr.bf16.gmra.mxu0 %v1659
    %v1920 = vpop.f32.mrf.mxu0
    %v1921 = vadd.f32 %v1693, %v1920
    %v1922 = vpop.f32.mrf.mxu0
    %v1923 = vpop.f32.mrf.mxu0
    %v1924 = vadd.f32 %v1693, %v1923
    %v1925 = vpop.f32.mrf.mxu0
    %1926 = vmatprep.mubr.bf16.mxu0 0
    %1927 = vmatmul.mubr.bf16.gmra.mxu0 %v1660
    %v1928 = vpop.f32.mrf.mxu0
    %v1929 = vadd.f32 %v1693, %v1928
    %v1930 = vpop.f32.mrf.mxu0
    %v1931 = vpop.f32.mrf.mxu0
    %v1932 = vadd.f32 %v1693, %v1931
    %v1933 = vpop.f32.mrf.mxu0
    %1934 = vmatprep.mubr.bf16.mxu0 0
    %1935 = vmatmul.mubr.bf16.gmra.mxu0 %v1661
    %v1936 = vpop.f32.mrf.mxu0
    %v1937 = vadd.f32 %v1693, %v1936
    %v1938 = vpop.f32.mrf.mxu0
    %v1939 = vpop.f32.mrf.mxu0
    %v1940 = vadd.f32 %v1693, %v1939
    %v1941 = vpop.f32.mrf.mxu0
    %1942 = vmatprep.mubr.bf16.mxu0 0
    %1943 = vmatmul.mubr.bf16.gmra.mxu0 %v1662
    %v1944 = vpop.f32.mrf.mxu0
    %v1945 = vadd.f32 %v1693, %v1944
    %v1946 = vpop.f32.mrf.mxu0
    %v1947 = vpop.f32.mrf.mxu0
    %v1948 = vadd.f32 %v1693, %v1947
    %v1949 = vpop.f32.mrf.mxu0
    %1950 = vmatprep.mubr.bf16.mxu0 0
    %1951 = vmatmul.mubr.bf16.gmra.mxu0 %v1663
    %v1952 = vpop.f32.mrf.mxu0
    %v1953 = vadd.f32 %v1693, %v1952
    %v1954 = vpop.f32.mrf.mxu0
    %v1955 = vpop.f32.mrf.mxu0
    %v1956 = vadd.f32 %v1693, %v1955
    %v1957 = vpop.f32.mrf.mxu0
    %1958 = vmatprep.mubr.bf16.mxu0 0
    %1959 = vmatmul.mubr.bf16.gmra.mxu0 %v1664
    %v1960 = vpop.f32.mrf.mxu0
    %v1961 = vadd.f32 %v1693, %v1960
    %v1962 = vpop.f32.mrf.mxu0
    %v1963 = vpop.f32.mrf.mxu0
    %v1964 = vadd.f32 %v1693, %v1963
    %v1965 = vpop.f32.mrf.mxu0
    %1966 = vmatprep.mubr.bf16.mxu0 0
    %1967 = vmatmul.mubr.bf16.gmra.mxu0 %v1665
    %v1968 = vpop.f32.mrf.mxu0
    %v1969 = vadd.f32 %v1693, %v1968
    %v1970 = vpop.f32.mrf.mxu0
    %v1971 = vpop.f32.mrf.mxu0
    %v1972 = vadd.f32 %v1693, %v1971
    %v1973 = vpop.f32.mrf.mxu0
    %1974 = vmatprep.mubr.bf16.mxu0 0
    %1975 = vmatmul.mubr.bf16.gmra.mxu0 %v1666
    %v1976 = vpop.f32.mrf.mxu0
    %v1977 = vadd.f32 %v1693, %v1976
    %v1978 = vpop.f32.mrf.mxu0
    %v1979 = vpop.f32.mrf.mxu0
    %v1980 = vadd.f32 %v1693, %v1979
    %v1981 = vpop.f32.mrf.mxu0
    %1982 = vmatprep.mubr.bf16.mxu0 0
    %1983 = vmatmul.mubr.bf16.gmra.mxu0 %v1667
    %v1984 = vpop.f32.mrf.mxu0
    %v1985 = vadd.f32 %v1693, %v1984
    %v1986 = vpop.f32.mrf.mxu0
    %v1987 = vpop.f32.mrf.mxu0
    %v1988 = vadd.f32 %v1693, %v1987
    %v1989 = vpop.f32.mrf.mxu0
    %1990 = vmatprep.mubr.bf16.mxu0 0
    %1991 = vmatmul.mubr.bf16.gmra.mxu0 %v1668
    %v1992 = vpop.f32.mrf.mxu0
    %v1993 = vadd.f32 %v1693, %v1992
    %v1994 = vpop.f32.mrf.mxu0
    %v1995 = vpop.f32.mrf.mxu0
    %v1996 = vadd.f32 %v1693, %v1995
    %v1997 = vpop.f32.mrf.mxu0
    %1998 = vmatprep.mubr.bf16.mxu0 0
    %1999 = vmatmul.mubr.bf16.gmra.mxu0 %v1669
    %v2000 = vpop.f32.mrf.mxu0
    %v2001 = vadd.f32 %v1693, %v2000
    %v2002 = vpop.f32.mrf.mxu0
    %v2003 = vpop.f32.mrf.mxu0
    %v2004 = vadd.f32 %v1693, %v2003
    %v2005 = vpop.f32.mrf.mxu0
    %2006 = vmatprep.mubr.bf16.mxu0 0
    %2007 = vmatmul.mubr.bf16.gmra.mxu0 %v1670
    %v2008 = vpop.f32.mrf.mxu0
    %v2009 = vadd.f32 %v1693, %v2008
    %v2010 = vpop.f32.mrf.mxu0
    %v2011 = vpop.f32.mrf.mxu0
    %v2012 = vadd.f32 %v1693, %v2011
    %v2013 = vpop.f32.mrf.mxu0
    %2014 = vmatprep.mubr.bf16.mxu0 0
    %2015 = vmatmul.mubr.bf16.gmra.mxu0 %v1671
    %v2016 = vpop.f32.mrf.mxu0
    %v2017 = vadd.f32 %v1693, %v2016
    %v2018 = vpop.f32.mrf.mxu0
    %v2019 = vpop.f32.mrf.mxu0
    %v2020 = vadd.f32 %v1693, %v2019
    %v2021 = vpop.f32.mrf.mxu0
    %2022 = vmatprep.mubr.bf16.mxu0 0
    %2023 = vmatmul.mubr.bf16.gmra.mxu0 %v1672
    %v2024 = vpop.f32.mrf.mxu0
    %v2025 = vadd.f32 %v1693, %v2024
    %v2026 = vpop.f32.mrf.mxu0
    %v2027 = vpop.f32.mrf.mxu0
    %v2028 = vadd.f32 %v1693, %v2027
    %v2029 = vpop.f32.mrf.mxu0
    %2030 = vdwg.mxu0
    %v2031 = vmax.f32 %v1777, 0.0
    %v2032 = vmax.f32 %v1780, 0.0
    %v2033 = vmax.f32 %v1785, 0.0
    %v2034 = vmax.f32 %v1788, 0.0
    %v2035 = vmax.f32 %v1793, 0.0
    %v2036 = vmax.f32 %v1796, 0.0
    %v2037 = vmax.f32 %v1801, 0.0
    %v2038 = vmax.f32 %v1804, 0.0
    %v2039 = vmax.f32 %v1809, 0.0
    %v2040 = vmax.f32 %v1812, 0.0
    %v2041 = vmax.f32 %v1817, 0.0
    %v2042 = vmax.f32 %v1820, 0.0
    %v2043 = vmax.f32 %v1825, 0.0
    %v2044 = vmax.f32 %v1828, 0.0
    %v2045 = vmax.f32 %v1833, 0.0
    %v2046 = vmax.f32 %v1836, 0.0
    %v2047 = vmax.f32 %v1841, 0.0
    %v2048 = vmax.f32 %v1844, 0.0
    %v2049 = vmax.f32 %v1849, 0.0
    %v2050 = vmax.f32 %v1852, 0.0
    %v2051 = vmax.f32 %v1857, 0.0
    %v2052 = vmax.f32 %v1860, 0.0
    %v2053 = vmax.f32 %v1865, 0.0
    %v2054 = vmax.f32 %v1868, 0.0
    %v2055 = vmax.f32 %v1873, 0.0
    %v2056 = vmax.f32 %v1876, 0.0
    %v2057 = vmax.f32 %v1881, 0.0
    %v2058 = vmax.f32 %v1884, 0.0
    %v2059 = vmax.f32 %v1889, 0.0
    %v2060 = vmax.f32 %v1892, 0.0
    %v2061 = vmax.f32 %v1897, 0.0
    %v2062 = vmax.f32 %v1900, 0.0
    %v2063 = vmax.f32 %v1905, 0.0
    %v2064 = vmax.f32 %v1908, 0.0
    %v2065 = vmax.f32 %v1913, 0.0
    %v2066 = vmax.f32 %v1916, 0.0
    %v2067 = vmax.f32 %v1921, 0.0
    %v2068 = vmax.f32 %v1924, 0.0
    %v2069 = vmax.f32 %v1929, 0.0
    %v2070 = vmax.f32 %v1932, 0.0
    %v2071 = vmax.f32 %v1937, 0.0
    %v2072 = vmax.f32 %v1940, 0.0
    %v2073 = vmax.f32 %v1945, 0.0
    %v2074 = vmax.f32 %v1948, 0.0
    %v2075 = vmax.f32 %v1953, 0.0
    %v2076 = vmax.f32 %v1956, 0.0
    %v2077 = vmax.f32 %v1961, 0.0
    %v2078 = vmax.f32 %v1964, 0.0
    %v2079 = vmax.f32 %v1969, 0.0
    %v2080 = vmax.f32 %v1972, 0.0
    %v2081 = vmax.f32 %v1977, 0.0
    %v2082 = vmax.f32 %v1980, 0.0
    %v2083 = vmax.f32 %v1985, 0.0
    %v2084 = vmax.f32 %v1988, 0.0
    %v2085 = vmax.f32 %v1993, 0.0
    %v2086 = vmax.f32 %v1996, 0.0
    %v2087 = vmax.f32 %v2001, 0.0
    %v2088 = vmax.f32 %v2004, 0.0
    %v2089 = vmax.f32 %v2009, 0.0
    %v2090 = vmax.f32 %v2012, 0.0
    %v2091 = vmax.f32 %v2017, 0.0
    %v2092 = vmax.f32 %v2020, 0.0
    %v2093 = vmax.f32 %v2025, 0.0
    %v2094 = vmax.f32 %v2028, 0.0
    %v2095 = vpack.c.bf16 %v2032, %v2031
    %v2096 = vpack.c.bf16 %v2034, %v2033
    %v2097 = vpack.c.bf16 %v2036, %v2035
    %v2098 = vpack.c.bf16 %v2038, %v2037
    %v2099 = vpack.c.bf16 %v2040, %v2039
    %v2100 = vpack.c.bf16 %v2042, %v2041
    %v2101 = vpack.c.bf16 %v2044, %v2043
    %v2102 = vpack.c.bf16 %v2046, %v2045
    %v2103 = vpack.c.bf16 %v2048, %v2047
    %v2104 = vpack.c.bf16 %v2050, %v2049
    %v2105 = vpack.c.bf16 %v2052, %v2051
    %v2106 = vpack.c.bf16 %v2054, %v2053
    %v2107 = vpack.c.bf16 %v2056, %v2055
    %v2108 = vpack.c.bf16 %v2058, %v2057
    %v2109 = vpack.c.bf16 %v2060, %v2059
    %v2110 = vpack.c.bf16 %v2062, %v2061
    %v2111 = vpack.c.bf16 %v2064, %v2063
    %v2112 = vpack.c.bf16 %v2066, %v2065
    %v2113 = vpack.c.bf16 %v2068, %v2067
    %v2114 = vpack.c.bf16 %v2070, %v2069
    %v2115 = vpack.c.bf16 %v2072, %v2071
    %v2116 = vpack.c.bf16 %v2074, %v2073
    %v2117 = vpack.c.bf16 %v2076, %v2075
    %v2118 = vpack.c.bf16 %v2078, %v2077
    %v2119 = vpack.c.bf16 %v2080, %v2079
    %v2120 = vpack.c.bf16 %v2082, %v2081
    %v2121 = vpack.c.bf16 %v2084, %v2083
    %v2122 = vpack.c.bf16 %v2086, %v2085
    %v2123 = vpack.c.bf16 %v2088, %v2087
    %v2124 = vpack.c.bf16 %v2090, %v2089
    %v2125 = vpack.c.bf16 %v2092, %v2091
    %v2126 = vpack.c.bf16 %v2094, %v2093
    %v2127 = vld [vmem:[#allocation5 + $0x140] sm:$0xf]
    %v2128 = vld [vmem:[#allocation5 + $0x144] sm:$0xf]
    %v2129 = vld [vmem:[#allocation5 + $0x148] sm:$0xf]
    %v2130 = vld [vmem:[#allocation5 + $0x14c] sm:$0xf]
    %v2131 = vld [vmem:[#allocation5 + $0x150] sm:$0xf]
    %v2132 = vld [vmem:[#allocation5 + $0x154] sm:$0xf]
    %v2133 = vld [vmem:[#allocation5 + $0x158] sm:$0xf]
    %v2134 = vld [vmem:[#allocation5 + $0x15c] sm:$0xf]
    %v2135 = vld [vmem:[#allocation5 + $0x160] sm:$0xf]
    %v2136 = vld [vmem:[#allocation5 + $0x164] sm:$0xf]
    %v2137 = vld [vmem:[#allocation5 + $0x168] sm:$0xf]
    %v2138 = vld [vmem:[#allocation5 + $0x16c] sm:$0xf]
    %v2139 = vld [vmem:[#allocation5 + $0x170] sm:$0xf]
    %v2140 = vld [vmem:[#allocation5 + $0x174] sm:$0xf]
    %v2141 = vld [vmem:[#allocation5 + $0x178] sm:$0xf]
    %v2142 = vld [vmem:[#allocation5 + $0x17c] sm:$0xf]
    %v2143 = vld [vmem:[#allocation7 + $0x4] sm:$0x1]
    %v2144 = vlaneseq
    %v2145 = vshrl.u32 %v2144, 7
    %v2146 = vsub.s32 0, %v2145
    %v2147 = vrot.slane %v2143, %v2146
    %v2164 = vunpack.c.l.b16 %v2127
    %v2165 = vunpack.c.l.b16 %v2128
    %v2166 = vunpack.c.l.b16 %v2129
    %v2167 = vunpack.c.l.b16 %v2130
    %v2168 = vunpack.c.l.b16 %v2131
    %v2169 = vunpack.c.l.b16 %v2132
    %v2170 = vunpack.c.l.b16 %v2133
    %v2171 = vunpack.c.l.b16 %v2134
    %v2172 = vunpack.c.l.b16 %v2135
    %v2173 = vunpack.c.l.b16 %v2136
    %v2174 = vunpack.c.l.b16 %v2137
    %v2175 = vunpack.c.l.b16 %v2138
    %v2176 = vunpack.c.l.b16 %v2139
    %v2177 = vunpack.c.l.b16 %v2140
    %v2178 = vunpack.c.l.b16 %v2141
    %v2179 = vunpack.c.l.b16 %v2142
    %v2180 = vpack.c.b16 %v2165, %v2164
    %v2181 = vpack.c.b16 %v2167, %v2166
    %v2182 = vpack.c.b16 %v2169, %v2168
    %v2183 = vpack.c.b16 %v2171, %v2170
    %v2184 = vpack.c.b16 %v2173, %v2172
    %v2185 = vpack.c.b16 %v2175, %v2174
    %v2186 = vpack.c.b16 %v2177, %v2176
    %v2187 = vpack.c.b16 %v2179, %v2178
    %2196 = vmatprep.subr.bf16.mxu0 0
    %2197 = vmatpush1.bf16.msra.mxu0 %v2187
    %2198 = vmatprep.subr.bf16.mxu0 0
    %2199 = vmatpush1.bf16.msra.mxu0 %v2186
    %2200 = vmatprep.subr.bf16.mxu0 0
    %2201 = vmatpush1.bf16.msra.mxu0 %v2185
    %2202 = vmatprep.subr.bf16.mxu0 0
    %2203 = vmatpush1.bf16.msra.mxu0 %v2184
    %2204 = vmatprep.subr.bf16.mxu0 0
    %2205 = vmatpush1.bf16.msra.mxu0 %v2183
    %2206 = vmatprep.subr.bf16.mxu0 0
    %2207 = vmatpush1.bf16.msra.mxu0 %v2182
    %2208 = vmatprep.subr.bf16.mxu0 0
    %2209 = vmatpush1.bf16.msra.mxu0 %v2181
    %2210 = vmatprep.subr.bf16.mxu0 0
    %2211 = vmatpush1.bf16.msra.mxu0 %v2180
    %2212 = vmatprep.subr.bf16.mxu0 0
    %2213 = vmatpush2.bf16.msra.mxu0 0
    %2214 = vmatprep.subr.bf16.mxu0 0
    %2215 = vmatpush2.bf16.msra.mxu0 0
    %2216 = vmatprep.subr.bf16.mxu0 0
    %2217 = vmatpush2.bf16.msra.mxu0 0
    %2218 = vmatprep.subr.bf16.mxu0 0
    %2219 = vmatpush2.bf16.msra.mxu0 0
    %2220 = vmatprep.subr.bf16.mxu0 0
    %2221 = vmatpush2.bf16.msra.mxu0 0
    %2222 = vmatprep.subr.bf16.mxu0 0
    %2223 = vmatpush2.bf16.msra.mxu0 0
    %2224 = vmatprep.subr.bf16.mxu0 0
    %2225 = vmatpush2.bf16.msra.mxu0 0
    %2226 = vmatprep.subr.bf16.mxu0 0
    %2227 = vmatpush2.bf16.msra.mxu0 0
    %2228 = vmatprep.mubr.bf16.mxu0 0
    %2229 = vmatmul.mubr.bf16.gmra.mxu0 %v2095
    %v2230 = vpop.f32.mrf.mxu0
    %v2231 = vadd.f32 %v2147, %v2230
    %v2232 = vpop.f32.mrf.mxu0
    %v2233 = vpop.f32.mrf.mxu0
    %v2234 = vadd.f32 %v2147, %v2233
    %v2235 = vpop.f32.mrf.mxu0
    %2236 = vmatprep.mubr.bf16.mxu0 0
    %2237 = vmatmul.mubr.bf16.gmra.mxu0 %v2096
    %v2238 = vpop.f32.mrf.mxu0
    %v2239 = vadd.f32 %v2147, %v2238
    %v2240 = vpop.f32.mrf.mxu0
    %v2241 = vpop.f32.mrf.mxu0
    %v2242 = vadd.f32 %v2147, %v2241
    %v2243 = vpop.f32.mrf.mxu0
    %2244 = vmatprep.mubr.bf16.mxu0 0
    %2245 = vmatmul.mubr.bf16.gmra.mxu0 %v2097
    %v2246 = vpop.f32.mrf.mxu0
    %v2247 = vadd.f32 %v2147, %v2246
    %v2248 = vpop.f32.mrf.mxu0
    %v2249 = vpop.f32.mrf.mxu0
    %v2250 = vadd.f32 %v2147, %v2249
    %v2251 = vpop.f32.mrf.mxu0
    %2252 = vmatprep.mubr.bf16.mxu0 0
    %2253 = vmatmul.mubr.bf16.gmra.mxu0 %v2098
    %v2254 = vpop.f32.mrf.mxu0
    %v2255 = vadd.f32 %v2147, %v2254
    %v2256 = vpop.f32.mrf.mxu0
    %v2257 = vpop.f32.mrf.mxu0
    %v2258 = vadd.f32 %v2147, %v2257
    %v2259 = vpop.f32.mrf.mxu0
    %2260 = vmatprep.mubr.bf16.mxu0 0
    %2261 = vmatmul.mubr.bf16.gmra.mxu0 %v2099
    %v2262 = vpop.f32.mrf.mxu0
    %v2263 = vadd.f32 %v2147, %v2262
    %v2264 = vpop.f32.mrf.mxu0
    %v2265 = vpop.f32.mrf.mxu0
    %v2266 = vadd.f32 %v2147, %v2265
    %v2267 = vpop.f32.mrf.mxu0
    %2268 = vmatprep.mubr.bf16.mxu0 0
    %2269 = vmatmul.mubr.bf16.gmra.mxu0 %v2100
    %v2270 = vpop.f32.mrf.mxu0
    %v2271 = vadd.f32 %v2147, %v2270
    %v2272 = vpop.f32.mrf.mxu0
    %v2273 = vpop.f32.mrf.mxu0
    %v2274 = vadd.f32 %v2147, %v2273
    %v2275 = vpop.f32.mrf.mxu0
    %2276 = vmatprep.mubr.bf16.mxu0 0
    %2277 = vmatmul.mubr.bf16.gmra.mxu0 %v2101
    %v2278 = vpop.f32.mrf.mxu0
    %v2279 = vadd.f32 %v2147, %v2278
    %v2280 = vpop.f32.mrf.mxu0
    %v2281 = vpop.f32.mrf.mxu0
    %v2282 = vadd.f32 %v2147, %v2281
    %v2283 = vpop.f32.mrf.mxu0
    %2284 = vmatprep.mubr.bf16.mxu0 0
    %2285 = vmatmul.mubr.bf16.gmra.mxu0 %v2102
    %v2286 = vpop.f32.mrf.mxu0
    %v2287 = vadd.f32 %v2147, %v2286
    %v2288 = vpop.f32.mrf.mxu0
    %v2289 = vpop.f32.mrf.mxu0
    %v2290 = vadd.f32 %v2147, %v2289
    %v2291 = vpop.f32.mrf.mxu0
    %2292 = vmatprep.mubr.bf16.mxu0 0
    %2293 = vmatmul.mubr.bf16.gmra.mxu0 %v2103
    %v2294 = vpop.f32.mrf.mxu0
    %v2295 = vadd.f32 %v2147, %v2294
    %v2296 = vpop.f32.mrf.mxu0
    %v2297 = vpop.f32.mrf.mxu0
    %v2298 = vadd.f32 %v2147, %v2297
    %v2299 = vpop.f32.mrf.mxu0
    %2300 = vmatprep.mubr.bf16.mxu0 0
    %2301 = vmatmul.mubr.bf16.gmra.mxu0 %v2104
    %v2302 = vpop.f32.mrf.mxu0
    %v2303 = vadd.f32 %v2147, %v2302
    %v2304 = vpop.f32.mrf.mxu0
    %v2305 = vpop.f32.mrf.mxu0
    %v2306 = vadd.f32 %v2147, %v2305
    %v2307 = vpop.f32.mrf.mxu0
    %2308 = vmatprep.mubr.bf16.mxu0 0
    %2309 = vmatmul.mubr.bf16.gmra.mxu0 %v2105
    %v2310 = vpop.f32.mrf.mxu0
    %v2311 = vadd.f32 %v2147, %v2310
    %v2312 = vpop.f32.mrf.mxu0
    %v2313 = vpop.f32.mrf.mxu0
    %v2314 = vadd.f32 %v2147, %v2313
    %v2315 = vpop.f32.mrf.mxu0
    %2316 = vmatprep.mubr.bf16.mxu0 0
    %2317 = vmatmul.mubr.bf16.gmra.mxu0 %v2106
    %v2318 = vpop.f32.mrf.mxu0
    %v2319 = vadd.f32 %v2147, %v2318
    %v2320 = vpop.f32.mrf.mxu0
    %v2321 = vpop.f32.mrf.mxu0
    %v2322 = vadd.f32 %v2147, %v2321
    %v2323 = vpop.f32.mrf.mxu0
    %2324 = vmatprep.mubr.bf16.mxu0 0
    %2325 = vmatmul.mubr.bf16.gmra.mxu0 %v2107
    %v2326 = vpop.f32.mrf.mxu0
    %v2327 = vadd.f32 %v2147, %v2326
    %v2328 = vpop.f32.mrf.mxu0
    %v2329 = vpop.f32.mrf.mxu0
    %v2330 = vadd.f32 %v2147, %v2329
    %v2331 = vpop.f32.mrf.mxu0
    %2332 = vmatprep.mubr.bf16.mxu0 0
    %2333 = vmatmul.mubr.bf16.gmra.mxu0 %v2108
    %v2334 = vpop.f32.mrf.mxu0
    %v2335 = vadd.f32 %v2147, %v2334
    %v2336 = vpop.f32.mrf.mxu0
    %v2337 = vpop.f32.mrf.mxu0
    %v2338 = vadd.f32 %v2147, %v2337
    %v2339 = vpop.f32.mrf.mxu0
    %2340 = vmatprep.mubr.bf16.mxu0 0
    %2341 = vmatmul.mubr.bf16.gmra.mxu0 %v2109
    %v2342 = vpop.f32.mrf.mxu0
    %v2343 = vadd.f32 %v2147, %v2342
    %v2344 = vpop.f32.mrf.mxu0
    %v2345 = vpop.f32.mrf.mxu0
    %v2346 = vadd.f32 %v2147, %v2345
    %v2347 = vpop.f32.mrf.mxu0
    %2348 = vmatprep.mubr.bf16.mxu0 0
    %2349 = vmatmul.mubr.bf16.gmra.mxu0 %v2110
    %v2350 = vpop.f32.mrf.mxu0
    %v2351 = vadd.f32 %v2147, %v2350
    %v2352 = vpop.f32.mrf.mxu0
    %v2353 = vpop.f32.mrf.mxu0
    %v2354 = vadd.f32 %v2147, %v2353
    %v2355 = vpop.f32.mrf.mxu0
    %2356 = vmatprep.mubr.bf16.mxu0 0
    %2357 = vmatmul.mubr.bf16.gmra.mxu0 %v2111
    %v2358 = vpop.f32.mrf.mxu0
    %v2359 = vadd.f32 %v2147, %v2358
    %v2360 = vpop.f32.mrf.mxu0
    %v2361 = vpop.f32.mrf.mxu0
    %v2362 = vadd.f32 %v2147, %v2361
    %v2363 = vpop.f32.mrf.mxu0
    %2364 = vmatprep.mubr.bf16.mxu0 0
    %2365 = vmatmul.mubr.bf16.gmra.mxu0 %v2112
    %v2366 = vpop.f32.mrf.mxu0
    %v2367 = vadd.f32 %v2147, %v2366
    %v2368 = vpop.f32.mrf.mxu0
    %v2369 = vpop.f32.mrf.mxu0
    %v2370 = vadd.f32 %v2147, %v2369
    %v2371 = vpop.f32.mrf.mxu0
    %2372 = vmatprep.mubr.bf16.mxu0 0
    %2373 = vmatmul.mubr.bf16.gmra.mxu0 %v2113
    %v2374 = vpop.f32.mrf.mxu0
    %v2375 = vadd.f32 %v2147, %v2374
    %v2376 = vpop.f32.mrf.mxu0
    %v2377 = vpop.f32.mrf.mxu0
    %v2378 = vadd.f32 %v2147, %v2377
    %v2379 = vpop.f32.mrf.mxu0
    %2380 = vmatprep.mubr.bf16.mxu0 0
    %2381 = vmatmul.mubr.bf16.gmra.mxu0 %v2114
    %v2382 = vpop.f32.mrf.mxu0
    %v2383 = vadd.f32 %v2147, %v2382
    %v2384 = vpop.f32.mrf.mxu0
    %v2385 = vpop.f32.mrf.mxu0
    %v2386 = vadd.f32 %v2147, %v2385
    %v2387 = vpop.f32.mrf.mxu0
    %2388 = vmatprep.mubr.bf16.mxu0 0
    %2389 = vmatmul.mubr.bf16.gmra.mxu0 %v2115
    %v2390 = vpop.f32.mrf.mxu0
    %v2391 = vadd.f32 %v2147, %v2390
    %v2392 = vpop.f32.mrf.mxu0
    %v2393 = vpop.f32.mrf.mxu0
    %v2394 = vadd.f32 %v2147, %v2393
    %v2395 = vpop.f32.mrf.mxu0
    %2396 = vmatprep.mubr.bf16.mxu0 0
    %2397 = vmatmul.mubr.bf16.gmra.mxu0 %v2116
    %v2398 = vpop.f32.mrf.mxu0
    %v2399 = vadd.f32 %v2147, %v2398
    %v2400 = vpop.f32.mrf.mxu0
    %v2401 = vpop.f32.mrf.mxu0
    %v2402 = vadd.f32 %v2147, %v2401
    %v2403 = vpop.f32.mrf.mxu0
    %2404 = vmatprep.mubr.bf16.mxu0 0
    %2405 = vmatmul.mubr.bf16.gmra.mxu0 %v2117
    %v2406 = vpop.f32.mrf.mxu0
    %v2407 = vadd.f32 %v2147, %v2406
    %v2408 = vpop.f32.mrf.mxu0
    %v2409 = vpop.f32.mrf.mxu0
    %v2410 = vadd.f32 %v2147, %v2409
    %v2411 = vpop.f32.mrf.mxu0
    %2412 = vmatprep.mubr.bf16.mxu0 0
    %2413 = vmatmul.mubr.bf16.gmra.mxu0 %v2118
    %v2414 = vpop.f32.mrf.mxu0
    %v2415 = vadd.f32 %v2147, %v2414
    %v2416 = vpop.f32.mrf.mxu0
    %v2417 = vpop.f32.mrf.mxu0
    %v2418 = vadd.f32 %v2147, %v2417
    %v2419 = vpop.f32.mrf.mxu0
    %2420 = vmatprep.mubr.bf16.mxu0 0
    %2421 = vmatmul.mubr.bf16.gmra.mxu0 %v2119
    %v2422 = vpop.f32.mrf.mxu0
    %v2423 = vadd.f32 %v2147, %v2422
    %v2424 = vpop.f32.mrf.mxu0
    %v2425 = vpop.f32.mrf.mxu0
    %v2426 = vadd.f32 %v2147, %v2425
    %v2427 = vpop.f32.mrf.mxu0
    %2428 = vmatprep.mubr.bf16.mxu0 0
    %2429 = vmatmul.mubr.bf16.gmra.mxu0 %v2120
    %v2430 = vpop.f32.mrf.mxu0
    %v2431 = vadd.f32 %v2147, %v2430
    %v2432 = vpop.f32.mrf.mxu0
    %v2433 = vpop.f32.mrf.mxu0
    %v2434 = vadd.f32 %v2147, %v2433
    %v2435 = vpop.f32.mrf.mxu0
    %2436 = vmatprep.mubr.bf16.mxu0 0
    %2437 = vmatmul.mubr.bf16.gmra.mxu0 %v2121
    %v2438 = vpop.f32.mrf.mxu0
    %v2439 = vadd.f32 %v2147, %v2438
    %v2440 = vpop.f32.mrf.mxu0
    %v2441 = vpop.f32.mrf.mxu0
    %v2442 = vadd.f32 %v2147, %v2441
    %v2443 = vpop.f32.mrf.mxu0
    %2444 = vmatprep.mubr.bf16.mxu0 0
    %2445 = vmatmul.mubr.bf16.gmra.mxu0 %v2122
    %v2446 = vpop.f32.mrf.mxu0
    %v2447 = vadd.f32 %v2147, %v2446
    %v2448 = vpop.f32.mrf.mxu0
    %v2449 = vpop.f32.mrf.mxu0
    %v2450 = vadd.f32 %v2147, %v2449
    %v2451 = vpop.f32.mrf.mxu0
    %2452 = vmatprep.mubr.bf16.mxu0 0
    %2453 = vmatmul.mubr.bf16.gmra.mxu0 %v2123
    %v2454 = vpop.f32.mrf.mxu0
    %v2455 = vadd.f32 %v2147, %v2454
    %v2456 = vpop.f32.mrf.mxu0
    %v2457 = vpop.f32.mrf.mxu0
    %v2458 = vadd.f32 %v2147, %v2457
    %v2459 = vpop.f32.mrf.mxu0
    %2460 = vmatprep.mubr.bf16.mxu0 0
    %2461 = vmatmul.mubr.bf16.gmra.mxu0 %v2124
    %v2462 = vpop.f32.mrf.mxu0
    %v2463 = vadd.f32 %v2147, %v2462
    %v2464 = vpop.f32.mrf.mxu0
    %v2465 = vpop.f32.mrf.mxu0
    %v2466 = vadd.f32 %v2147, %v2465
    %v2467 = vpop.f32.mrf.mxu0
    %2468 = vmatprep.mubr.bf16.mxu0 0
    %2469 = vmatmul.mubr.bf16.gmra.mxu0 %v2125
    %v2470 = vpop.f32.mrf.mxu0
    %v2471 = vadd.f32 %v2147, %v2470
    %v2472 = vpop.f32.mrf.mxu0
    %v2473 = vpop.f32.mrf.mxu0
    %v2474 = vadd.f32 %v2147, %v2473
    %v2475 = vpop.f32.mrf.mxu0
    %2476 = vmatprep.mubr.bf16.mxu0 0
    %2477 = vmatmul.mubr.bf16.gmra.mxu0 %v2126
    %v2478 = vpop.f32.mrf.mxu0
    %v2479 = vadd.f32 %v2147, %v2478
    %v2480 = vpop.f32.mrf.mxu0
    %v2481 = vpop.f32.mrf.mxu0
    %v2482 = vadd.f32 %v2147, %v2481
    %v2483 = vpop.f32.mrf.mxu0
    %2484 = vdwg.mxu0
    %v2485 = vpack.c.bf16 %v2234, %v2231
    %v2486 = vpack.c.bf16 %v2242, %v2239
    %v2487 = vpack.c.bf16 %v2250, %v2247
    %v2488 = vpack.c.bf16 %v2258, %v2255
    %v2489 = vpack.c.bf16 %v2266, %v2263
    %v2490 = vpack.c.bf16 %v2274, %v2271
    %v2491 = vpack.c.bf16 %v2282, %v2279
    %v2492 = vpack.c.bf16 %v2290, %v2287
    %v2493 = vpack.c.bf16 %v2298, %v2295
    %v2494 = vpack.c.bf16 %v2306, %v2303
    %v2495 = vpack.c.bf16 %v2314, %v2311
    %v2496 = vpack.c.bf16 %v2322, %v2319
    %v2497 = vpack.c.bf16 %v2330, %v2327
    %v2498 = vpack.c.bf16 %v2338, %v2335
    %v2499 = vpack.c.bf16 %v2346, %v2343
    %v2500 = vpack.c.bf16 %v2354, %v2351
    %v2501 = vpack.c.bf16 %v2362, %v2359
    %v2502 = vpack.c.bf16 %v2370, %v2367
    %v2503 = vpack.c.bf16 %v2378, %v2375
    %v2504 = vpack.c.bf16 %v2386, %v2383
    %v2505 = vpack.c.bf16 %v2394, %v2391
    %v2506 = vpack.c.bf16 %v2402, %v2399
    %v2507 = vpack.c.bf16 %v2410, %v2407
    %v2508 = vpack.c.bf16 %v2418, %v2415
    %v2509 = vpack.c.bf16 %v2426, %v2423
    %v2510 = vpack.c.bf16 %v2434, %v2431
    %v2511 = vpack.c.bf16 %v2442, %v2439
    %v2512 = vpack.c.bf16 %v2450, %v2447
    %v2513 = vpack.c.bf16 %v2458, %v2455
    %v2514 = vpack.c.bf16 %v2466, %v2463
    %v2515 = vpack.c.bf16 %v2474, %v2471
    %v2516 = vpack.c.bf16 %v2482, %v2479
    %v2549 = vunpack.c.l.b16 %v2485
    %v2550 = vunpack.c.h.b16 %v2485
    %v2551 = vunpack.c.l.b16 %v2486
    %v2552 = vunpack.c.h.b16 %v2486
    %v2553 = vunpack.c.l.b16 %v2487
    %v2554 = vunpack.c.h.b16 %v2487
    %v2555 = vunpack.c.l.b16 %v2488
    %v2556 = vunpack.c.h.b16 %v2488
    %v2557 = vunpack.c.l.b16 %v2489
    %v2558 = vunpack.c.h.b16 %v2489
    %v2559 = vunpack.c.l.b16 %v2490
    %v2560 = vunpack.c.h.b16 %v2490
    %v2561 = vunpack.c.l.b16 %v2491
    %v2562 = vunpack.c.h.b16 %v2491
    %v2563 = vunpack.c.l.b16 %v2492
    %v2564 = vunpack.c.h.b16 %v2492
    %v2565 = vunpack.c.l.b16 %v2493
    %v2566 = vunpack.c.h.b16 %v2493
    %v2567 = vunpack.c.l.b16 %v2494
    %v2568 = vunpack.c.h.b16 %v2494
    %v2569 = vunpack.c.l.b16 %v2495
    %v2570 = vunpack.c.h.b16 %v2495
    %v2571 = vunpack.c.l.b16 %v2496
    %v2572 = vunpack.c.h.b16 %v2496
    %v2573 = vunpack.c.l.b16 %v2497
    %v2574 = vunpack.c.h.b16 %v2497
    %v2575 = vunpack.c.l.b16 %v2498
    %v2576 = vunpack.c.h.b16 %v2498
    %v2577 = vunpack.c.l.b16 %v2499
    %v2578 = vunpack.c.h.b16 %v2499
    %v2579 = vunpack.c.l.b16 %v2500
    %v2580 = vunpack.c.h.b16 %v2500
    %v2581 = vunpack.c.l.b16 %v2501
    %v2582 = vunpack.c.h.b16 %v2501
    %v2583 = vunpack.c.l.b16 %v2502
    %v2584 = vunpack.c.h.b16 %v2502
    %v2585 = vunpack.c.l.b16 %v2503
    %v2586 = vunpack.c.h.b16 %v2503
    %v2587 = vunpack.c.l.b16 %v2504
    %v2588 = vunpack.c.h.b16 %v2504
    %v2589 = vunpack.c.l.b16 %v2505
    %v2590 = vunpack.c.h.b16 %v2505
    %v2591 = vunpack.c.l.b16 %v2506
    %v2592 = vunpack.c.h.b16 %v2506
    %v2593 = vunpack.c.l.b16 %v2507
    %v2594 = vunpack.c.h.b16 %v2507
    %v2595 = vunpack.c.l.b16 %v2508
    %v2596 = vunpack.c.h.b16 %v2508
    %v2597 = vunpack.c.l.b16 %v2509
    %v2598 = vunpack.c.h.b16 %v2509
    %v2599 = vunpack.c.l.b16 %v2510
    %v2600 = vunpack.c.h.b16 %v2510
    %v2601 = vunpack.c.l.b16 %v2511
    %v2602 = vunpack.c.h.b16 %v2511
    %v2603 = vunpack.c.l.b16 %v2512
    %v2604 = vunpack.c.h.b16 %v2512
    %v2605 = vunpack.c.l.b16 %v2513
    %v2606 = vunpack.c.h.b16 %v2513
    %v2607 = vunpack.c.l.b16 %v2514
    %v2608 = vunpack.c.h.b16 %v2514
    %v2609 = vunpack.c.l.b16 %v2515
    %v2610 = vunpack.c.h.b16 %v2515
    %v2611 = vunpack.c.l.b16 %v2516
    %v2612 = vunpack.c.h.b16 %v2516
    %v2613 = vpack.c.b16 %v2549, %v2549
    %v2614 = vpack.c.b16 %v2550, %v2550
    %v2615 = vpack.c.b16 %v2551, %v2551
    %v2616 = vpack.c.b16 %v2552, %v2552
    %v2617 = vpack.c.b16 %v2553, %v2553
    %v2618 = vpack.c.b16 %v2554, %v2554
    %v2619 = vpack.c.b16 %v2555, %v2555
    %v2620 = vpack.c.b16 %v2556, %v2556
    %v2621 = vpack.c.b16 %v2557, %v2557
    %v2622 = vpack.c.b16 %v2558, %v2558
    %v2623 = vpack.c.b16 %v2559, %v2559
    %v2624 = vpack.c.b16 %v2560, %v2560
    %v2625 = vpack.c.b16 %v2561, %v2561
    %v2626 = vpack.c.b16 %v2562, %v2562
    %v2627 = vpack.c.b16 %v2563, %v2563
    %v2628 = vpack.c.b16 %v2564, %v2564
    %v2629 = vpack.c.b16 %v2565, %v2565
    %v2630 = vpack.c.b16 %v2566, %v2566
    %v2631 = vpack.c.b16 %v2567, %v2567
    %v2632 = vpack.c.b16 %v2568, %v2568
    %v2633 = vpack.c.b16 %v2569, %v2569
    %v2634 = vpack.c.b16 %v2570, %v2570
    %v2635 = vpack.c.b16 %v2571, %v2571
    %v2636 = vpack.c.b16 %v2572, %v2572
    %v2637 = vpack.c.b16 %v2573, %v2573
    %v2638 = vpack.c.b16 %v2574, %v2574
    %v2639 = vpack.c.b16 %v2575, %v2575
    %v2640 = vpack.c.b16 %v2576, %v2576
    %v2641 = vpack.c.b16 %v2577, %v2577
    %v2642 = vpack.c.b16 %v2578, %v2578
    %v2643 = vpack.c.b16 %v2579, %v2579
    %v2644 = vpack.c.b16 %v2580, %v2580
    %v2645 = vpack.c.b16 %v2581, %v2581
    %v2646 = vpack.c.b16 %v2582, %v2582
    %v2647 = vpack.c.b16 %v2583, %v2583
    %v2648 = vpack.c.b16 %v2584, %v2584
    %v2649 = vpack.c.b16 %v2585, %v2585
    %v2650 = vpack.c.b16 %v2586, %v2586
    %v2651 = vpack.c.b16 %v2587, %v2587
    %v2652 = vpack.c.b16 %v2588, %v2588
    %v2653 = vpack.c.b16 %v2589, %v2589
    %v2654 = vpack.c.b16 %v2590, %v2590
    %v2655 = vpack.c.b16 %v2591, %v2591
    %v2656 = vpack.c.b16 %v2592, %v2592
    %v2657 = vpack.c.b16 %v2593, %v2593
    %v2658 = vpack.c.b16 %v2594, %v2594
    %v2659 = vpack.c.b16 %v2595, %v2595
    %v2660 = vpack.c.b16 %v2596, %v2596
    %v2661 = vpack.c.b16 %v2597, %v2597
    %v2662 = vpack.c.b16 %v2598, %v2598
    %v2663 = vpack.c.b16 %v2599, %v2599
    %v2664 = vpack.c.b16 %v2600, %v2600
    %v2665 = vpack.c.b16 %v2601, %v2601
    %v2666 = vpack.c.b16 %v2602, %v2602
    %v2667 = vpack.c.b16 %v2603, %v2603
    %v2668 = vpack.c.b16 %v2604, %v2604
    %v2669 = vpack.c.b16 %v2605, %v2605
    %v2670 = vpack.c.b16 %v2606, %v2606
    %v2671 = vpack.c.b16 %v2607, %v2607
    %v2672 = vpack.c.b16 %v2608, %v2608
    %v2673 = vpack.c.b16 %v2609, %v2609
    %v2674 = vpack.c.b16 %v2610, %v2610
    %v2675 = vpack.c.b16 %v2611, %v2611
    %v2676 = vpack.c.b16 %v2612, %v2612
    %2741 = vst [vmem:[#allocation8] sm:$0xf] %v2613
    %2742 = vst [vmem:[#allocation8 + $0x4] sm:$0xf] %v2614
    %2743 = vst [vmem:[#allocation8 + $0x8] sm:$0xf] %v2615
    %2744 = vst [vmem:[#allocation8 + $0xc] sm:$0xf] %v2616
    %2745 = vst [vmem:[#allocation8 + $0x10] sm:$0xf] %v2617
    %2746 = vst [vmem:[#allocation8 + $0x14] sm:$0xf] %v2618
    %2747 = vst [vmem:[#allocation8 + $0x18] sm:$0xf] %v2619
    %2748 = vst [vmem:[#allocation8 + $0x1c] sm:$0xf] %v2620
    %2749 = vst [vmem:[#allocation8 + $0x20] sm:$0xf] %v2621
    %2750 = vst [vmem:[#allocation8 + $0x24] sm:$0xf] %v2622
    %2751 = vst [vmem:[#allocation8 + $0x28] sm:$0xf] %v2623
    %2752 = vst [vmem:[#allocation8 + $0x2c] sm:$0xf] %v2624
    %2753 = vst [vmem:[#allocation8 + $0x30] sm:$0xf] %v2625
    %2754 = vst [vmem:[#allocation8 + $0x34] sm:$0xf] %v2626
    %2755 = vst [vmem:[#allocation8 + $0x38] sm:$0xf] %v2627
    %2756 = vst [vmem:[#allocation8 + $0x3c] sm:$0xf] %v2628
    %2757 = vst [vmem:[#allocation8 + $0x40] sm:$0xf] %v2629
    %2758 = vst [vmem:[#allocation8 + $0x44] sm:$0xf] %v2630
    %2759 = vst [vmem:[#allocation8 + $0x48] sm:$0xf] %v2631
    %2760 = vst [vmem:[#allocation8 + $0x4c] sm:$0xf] %v2632
    %2761 = vst [vmem:[#allocation8 + $0x50] sm:$0xf] %v2633
    %2762 = vst [vmem:[#allocation8 + $0x54] sm:$0xf] %v2634
    %2763 = vst [vmem:[#allocation8 + $0x58] sm:$0xf] %v2635
    %2764 = vst [vmem:[#allocation8 + $0x5c] sm:$0xf] %v2636
    %2765 = vst [vmem:[#allocation8 + $0x60] sm:$0xf] %v2637
    %2766 = vst [vmem:[#allocation8 + $0x64] sm:$0xf] %v2638
    %2767 = vst [vmem:[#allocation8 + $0x68] sm:$0xf] %v2639
    %2768 = vst [vmem:[#allocation8 + $0x6c] sm:$0xf] %v2640
    %2769 = vst [vmem:[#allocation8 + $0x70] sm:$0xf] %v2641
    %2770 = vst [vmem:[#allocation8 + $0x74] sm:$0xf] %v2642
    %2771 = vst [vmem:[#allocation8 + $0x78] sm:$0xf] %v2643
    %2772 = vst [vmem:[#allocation8 + $0x7c] sm:$0xf] %v2644
    %2773 = vst [vmem:[#allocation8 + $0x80] sm:$0xf] %v2645
    %2774 = vst [vmem:[#allocation8 + $0x84] sm:$0xf] %v2646
    %2775 = vst [vmem:[#allocation8 + $0x88] sm:$0xf] %v2647
    %2776 = vst [vmem:[#allocation8 + $0x8c] sm:$0xf] %v2648
    %2777 = vst [vmem:[#allocation8 + $0x90] sm:$0xf] %v2649
    %2778 = vst [vmem:[#allocation8 + $0x94] sm:$0xf] %v2650
    %2779 = vst [vmem:[#allocation8 + $0x98] sm:$0xf] %v2651
    %2780 = vst [vmem:[#allocation8 + $0x9c] sm:$0xf] %v2652
    %2781 = vst [vmem:[#allocation8 + $0xa0] sm:$0xf] %v2653
    %2782 = vst [vmem:[#allocation8 + $0xa4] sm:$0xf] %v2654
    %2783 = vst [vmem:[#allocation8 + $0xa8] sm:$0xf] %v2655
    %2784 = vst [vmem:[#allocation8 + $0xac] sm:$0xf] %v2656
    %2785 = vst [vmem:[#allocation8 + $0xb0] sm:$0xf] %v2657
    %2786 = vst [vmem:[#allocation8 + $0xb4] sm:$0xf] %v2658
    %2787 = vst [vmem:[#allocation8 + $0xb8] sm:$0xf] %v2659
    %2788 = vst [vmem:[#allocation8 + $0xbc] sm:$0xf] %v2660
    %2789 = vst [vmem:[#allocation8 + $0xc0] sm:$0xf] %v2661
    %2790 = vst [vmem:[#allocation8 + $0xc4] sm:$0xf] %v2662
    %2791 = vst [vmem:[#allocation8 + $0xc8] sm:$0xf] %v2663
    %2792 = vst [vmem:[#allocation8 + $0xcc] sm:$0xf] %v2664
    %2793 = vst [vmem:[#allocation8 + $0xd0] sm:$0xf] %v2665
    %2794 = vst [vmem:[#allocation8 + $0xd4] sm:$0xf] %v2666
    %2795 = vst [vmem:[#allocation8 + $0xd8] sm:$0xf] %v2667
    %2796 = vst [vmem:[#allocation8 + $0xdc] sm:$0xf] %v2668
    %2797 = vst [vmem:[#allocation8 + $0xe0] sm:$0xf] %v2669
    %2798 = vst [vmem:[#allocation8 + $0xe4] sm:$0xf] %v2670
    %2799 = vst [vmem:[#allocation8 + $0xe8] sm:$0xf] %v2671
    %2800 = vst [vmem:[#allocation8 + $0xec] sm:$0xf] %v2672
    %2801 = vst [vmem:[#allocation8 + $0xf0] sm:$0xf] %v2673
    %2802 = vst [vmem:[#allocation8 + $0xf4] sm:$0xf] %v2674
    %2803 = vst [vmem:[#allocation8 + $0xf8] sm:$0xf] %v2675
    %2804 = vst [vmem:[#allocation8 + $0xfc] sm:$0xf] %v2676
    // Predicated region
    $region26: #{tpu_custom_call.1} parent=1 // pred_check
      _
    $region27: #{tpu_custom_call.1} parent=1 // pred_check_branch
      %2806 = sbr.rel (0) target = $region29
    $region28: #{tpu_custom_call.1} parent=1 // pred_region
      %s2808 = ssub.s32 4096, 4096
      %2809 = vsyncadd [#allocation4], %s2808
      %s2810 = sshll.u32 [#allocation8], 4
      %s2811 = int_to_ptr.vmem [resolvable:$true] %s2810
      %2816 = dma.vmem_to_hbm [thread:$0]  %s2811, 4096, %s3, [#allocation4], 64, 64, 4
    $region29: #{tpu_custom_call.1} parent=1 // pred_fallthru
      _
    // Predicated region
    $region30: #{tpu_custom_call.1} parent=1 // pred_check
      _
    $region31: #{tpu_custom_call.1} parent=1 // pred_check_branch
      %2818 = sbr.rel (0) target = $region33
    $region32: #{tpu_custom_call.1} parent=1 // pred_region
      %2819 = dma.done [#allocation4], 4096
    $region33: #{tpu_custom_call.1} parent=1 // pred_fallthru
      _
    %2820 = vsyncpa [#allocation3], 1
    %2821 = vsyncpa [#allocation6], 1
    %2822 = vsyncpa [#allocation4], 1

</llo_original>
